<compile_context>
chip_gen: v7x
topology: tpu7x:2x2x1
jax: 0.10.0
libtpu: 0.0.40
codegen_flags: <defaults>
</compile_context>

<pallas_src>
import jax
import jax.numpy as jnp
from jax import lax
from jax.experimental import pallas as pl
from jax.experimental.pallas import tpu as pltpu


def _round_up(x, m):
    return ((x + m - 1) // m) * m


# ----------------------------- Pallas kernel ------------------------------ #
def _lstm_morph_kernel(x_ref, wih_ref, whh_ref, b_ref, wout_ref, bout_ref,
                       out_ref, h_ref, c_ref, hs_ref):
    """One grid step == one block of TB time steps (whole sequence here).

    x_ref    : (TB*BP, E)    time-major flattened embeddings for this block
                             (row t*BP + b  <->  (time t, batch b))
    wih_ref  : (E, 4*HP)     input->gates weight, per-gate zero-padded to HP
    whh_ref  : (HP, 4*HP)    hidden->gates weight, per-gate zero-padded
    b_ref    : (1, 4*HP)     b_ih + b_hh, per-gate zero-padded
    wout_ref : (HP, MP)      hidden2morph weight, zero-padded rows/cols
    bout_ref : (1, MP)       hidden2morph bias, pad columns = -1e30
    out_ref  : (TB*BP, MP)   lane-dense log-softmax scores for this block
    h_ref    : (BP, HP)      VMEM scratch, hidden state carried across steps
    c_ref    : (BP, HP)      VMEM scratch, cell state carried across steps
    hs_ref   : (TB*BP, HP)   VMEM scratch, per-step hidden states of the block
    """
    rows, _ = x_ref.shape
    BP, HP = h_ref.shape
    tb = rows // BP

    @pl.when(pl.program_id(0) == 0)
    def _():
        h_ref[...] = jnp.zeros_like(h_ref)
        c_ref[...] = jnp.zeros_like(c_ref)

    # -- Prologue: hoisted input projection.  One batched matmul for the whole
    #    time block replaces TB tiny per-step (BP,E)x(E,4HP) matmuls and the
    #    per-step bias broadcast.
    gates_x = (jnp.dot(x_ref[...], wih_ref[...],
                       preferred_element_type=jnp.float32)
               + b_ref[...])                                    # (TB*BP, 4*HP)

    whh = whh_ref[...]
    h = h_ref[...]
    c = c_ref[...]

    # -- Serial recurrence, statically unrolled over the TB steps of this block
    #    (static trip count => every slice below is a static, (8,128)-aligned
    #    slice).  Only h @ W_hh remains on the serial critical path; h/c stay
    #    in vregs across the unrolled steps.
    for t in range(tb):
        gates = gates_x[t * BP:(t + 1) * BP, :] + jnp.dot(
            h, whh, preferred_element_type=jnp.float32)         # (BP, 4*HP)
        # PyTorch LSTM gate order: i, f, g, o.  Each gate chunk is HP = 128*k
        # wide, so these are lane-aligned, shuffle-free slices.
        i_g = jax.nn.sigmoid(gates[:, 0 * HP:1 * HP])
        f_g = jax.nn.sigmoid(gates[:, 1 * HP:2 * HP])
        g_g = jnp.tanh(gates[:, 2 * HP:3 * HP])
        o_g = jax.nn.sigmoid(gates[:, 3 * HP:4 * HP])
        c = f_g * c + i_g * g_g
        h = o_g * jnp.tanh(c)
        hs_ref[t * BP:(t + 1) * BP, :] = h      # sublane-aligned store

    h_ref[...] = h
    c_ref[...] = c

    # -- Epilogue: hidden2morph + log-softmax, batched over the whole block
    #    (hoisted out of the serial loop) and stored lane-dense (MP = 128*k).
    logits = (jnp.dot(hs_ref[...], wout_ref[...],
                      preferred_element_type=jnp.float32)
              + bout_ref[...])                                  # (TB*BP, MP)
    mx = jnp.max(logits, axis=-1, keepdims=True)
    shifted = logits - mx
    lse = jnp.log(jnp.sum(jnp.exp(shifted), axis=-1, keepdims=True))
    out_ref[...] = shifted - lse


def lstm_morph_pallas(x_flat, w_ih_p, w_hh_p, b_p, w_out_p, b_out_p,
                      batch_pad, time_block):
    """x_flat: (T*BP, E) time-major-flattened embeddings (row t*BP + b <-> (t, b)).

    All weight arguments are already padded to (8,128)-friendly shapes.
    Returns (T*BP, MP) log-softmax scores over the padded morph axis.
    """
    total_rows, E = x_flat.shape
    BP = batch_pad
    T = total_rows // BP
    HP = w_hh_p.shape[0]
    MP = w_out_p.shape[1]
    assert T % time_block == 0, "time_block must divide the sequence length"
    n_blocks = T // time_block
    block_rows = time_block * BP

    return pl.pallas_call(
        _lstm_morph_kernel,
        out_shape=jax.ShapeDtypeStruct((total_rows, MP), jnp.float32),
        grid_spec=pltpu.PrefetchScalarGridSpec(
            num_scalar_prefetch=0,
            grid=(n_blocks,),
            in_specs=[
                pl.BlockSpec((block_rows, E), lambda i: (i, 0)),     # x block
                pl.BlockSpec((E, 4 * HP), lambda i: (0, 0)),         # W_ih (resident)
                pl.BlockSpec((HP, 4 * HP), lambda i: (0, 0)),        # W_hh (resident)
                pl.BlockSpec((1, 4 * HP), lambda i: (0, 0)),         # bias
                pl.BlockSpec((HP, MP), lambda i: (0, 0)),            # W_out (padded)
                pl.BlockSpec((1, MP), lambda i: (0, 0)),             # b_out (padded)
            ],
            out_specs=pl.BlockSpec((block_rows, MP), lambda i: (i, 0)),
            scratch_shapes=[
                pltpu.VMEM((BP, HP), jnp.float32),           # h carry
                pltpu.VMEM((BP, HP), jnp.float32),           # c carry
                pltpu.VMEM((block_rows, HP), jnp.float32),   # hidden-state slab
            ],
        ),
        compiler_params=pltpu.CompilerParams(
            dimension_semantics=("arbitrary",),   # time recurrence is sequential
            vmem_limit_bytes=32 * 1024 * 1024,
        ),
    )(x_flat, w_ih_p, w_hh_p, b_p, w_out_p, b_out_p)


# ------------------------------ Model wrapper ------------------------------ #
def init_params(key, vocab_size, embedding_dim, hidden_dim, morphs_size):
    ks = jax.random.split(key, 7)
    s = 0.1
    return {
        "embedding": jax.random.normal(ks[0], (vocab_size, embedding_dim), jnp.float32) * s,
        # Stored pre-transposed for the x @ W convention inside the kernel.
        "w_ih_t": jax.random.normal(ks[1], (embedding_dim, 4 * hidden_dim), jnp.float32) * s,
        "w_hh_t": jax.random.normal(ks[2], (hidden_dim, 4 * hidden_dim), jnp.float32) * s,
        "b_ih": jax.random.normal(ks[3], (4 * hidden_dim,), jnp.float32) * s,
        "b_hh": jax.random.normal(ks[4], (4 * hidden_dim,), jnp.float32) * s,
        "w_out_t": jax.random.normal(ks[5], (hidden_dim, morphs_size), jnp.float32) * s,
        "b_out": jax.random.normal(ks[6], (morphs_size,), jnp.float32) * s,
    }


def _pad_gate_weights(w, in_dim_pad, h, hp):
    """(in_dim, 4H) -> (in_dim_pad, 4*HP); each gate's H cols land in its own
    HP-wide, zero-padded chunk (pad cols/rows are exactly zero)."""
    in_dim = w.shape[0]
    out = jnp.zeros((in_dim_pad, 4 * hp), w.dtype)
    for g in range(4):
        out = out.at[:in_dim, g * hp:g * hp + h].set(w[:, g * h:(g + 1) * h])
    return out


def morph_model_forward(params, sentence, time_block=None):
    """sentence: (B, T) int32 token ids. Returns (B, T, M) log-softmax scores."""
    B, T = sentence.shape
    E = params["embedding"].shape[1]
    H = params["w_hh_t"].shape[0]
    M = params["w_out_t"].shape[1]
    BP = _round_up(B, 8)              # sublane-aligned per-step row slices
    HP = _round_up(H, 128)            # lane-aligned gate slices / hidden slab
    MP = _round_up(M, 128)            # lane-dense output store
    if time_block is None:
        time_block = T                # whole sequence in one grid step

    # --- plain-JAX glue: embedding gather + time-major row flattening -------
    emb = jnp.take(params["embedding"], sentence, axis=0)        # (B, T, E)
    x_tbe = jnp.transpose(emb, (1, 0, 2))                        # (T, B, E)
    x_tbe = jnp.pad(x_tbe, ((0, 0), (0, BP - B), (0, 0)))        # (T, BP, E)
    x_flat = x_tbe.reshape(T * BP, E)                            # (T*BP, E)

    # --- per-gate zero-padded LSTM weights (pad h/c columns stay exactly 0) --
    w_ih_p = _pad_gate_weights(params["w_ih_t"], E, H, HP)       # (E, 4*HP)
    w_hh_p = _pad_gate_weights(params["w_hh_t"], HP, H, HP)      # (HP, 4*HP)
    b_comb = (params["b_ih"] + params["b_hh"]).reshape(1, -1)    # (1, 4H)
    b_p = _pad_gate_weights(b_comb, 1, H, HP)                    # (1, 4*HP)

    # Pad the output projection to a lane-dense width.  Pad bias = -1e30 so
    # padded logits contribute exp() == 0: log-softmax over MP columns equals
    # log-softmax over the real M columns.
    w_out_p = jnp.zeros((HP, MP), jnp.float32).at[:H, :M].set(params["w_out_t"])
    b_out_p = jnp.full((1, MP), -1e30, jnp.float32).at[:, :M].set(
        params["b_out"].reshape(1, -1))

    out_flat = lstm_morph_pallas(x_flat, w_ih_p, w_hh_p, b_p, w_out_p, b_out_p,
                                 batch_pad=BP, time_block=time_block)  # (T*BP, MP)
    out_tbm = out_flat.reshape(T, BP, MP)[:, :B, :M]             # (T, B, M)
    return jnp.transpose(out_tbm, (1, 0, 2))                     # (B, T, M)


# ------------------------------ Reference (JAX) ----------------------------- #
def morph_model_reference(params, sentence):
    emb = jnp.take(params["embedding"], sentence, axis=0)   # (B, T, E)
    B, T, E = emb.shape
    H = params["w_hh_t"].shape[0]
    b_comb = params["b_ih"] + params["b_hh"]

    def step(carry, x_t):
        h, c = carry
        gates = x_t @ params["w_ih_t"] + h @ params["w_hh_t"] + b_comb
        i = jax.nn.sigmoid(gates[:, 0 * H:1 * H])
        f = jax.nn.sigmoid(gates[:, 1 * H:2 * H])
        g = jnp.tanh(gates[:, 2 * H:3 * H])
        o = jax.nn.sigmoid(gates[:, 3 * H:4 * H])
        c = f * c + i * g
        h = o * jnp.tanh(c)
        return (h, c), h

    h0 = jnp.zeros((B, H), jnp.float32)
    c0 = jnp.zeros((B, H), jnp.float32)
    _, hs = lax.scan(step, (h0, c0), jnp.transpose(emb, (1, 0, 2)))  # (T, B, H)
    hs = jnp.transpose(hs, (1, 0, 2))                                 # (B, T, H)
    logits = hs @ params["w_out_t"] + params["b_out"]
    return jax.nn.log_softmax(logits, axis=2)


# ----------------------------------- Main ----------------------------------- #
if __name__ == "__main__":
    vocab_size, embedding_dim, hidden_dim, morphs_size = 50, 16, 32, 10
    batch, seq = 2, 8

    key = jax.random.PRNGKey(0)
    pkey, skey = jax.random.split(key)
    params = init_params(pkey, vocab_size, embedding_dim, hidden_dim, morphs_size)
    sentence = jax.random.randint(skey, (batch, seq), 0, vocab_size, dtype=jnp.int32)

    fwd = jax.jit(morph_model_forward)
    out = jax.block_until_ready(fwd(params, sentence))

    ref = jax.block_until_ready(jax.jit(morph_model_reference)(params, sentence))
    assert out.shape == (batch, seq, morphs_size)
    assert jnp.allclose(out, ref, atol=1e-5, rtol=1e-5), "Pallas kernel mismatch vs JAX reference"

    print("KERNEL_OK")
</pallas_src>

<mosaic_0001>
module attributes {stable_mosaic.version = 11 : i64} {
  func.func @_lstm_morph_kernel(%arg0: i32, %arg1: memref<64x16xf32, #tpu.memory_space<vmem>>, %arg2: memref<16x512xf32, #tpu.memory_space<vmem>>, %arg3: memref<128x512xf32, #tpu.memory_space<vmem>>, %arg4: memref<1x512xf32, #tpu.memory_space<vmem>>, %arg5: memref<128x128xf32, #tpu.memory_space<vmem>>, %arg6: memref<1x128xf32, #tpu.memory_space<vmem>>, %arg7: memref<64x128xf32, #tpu.memory_space<vmem>>, %arg8: memref<8x128xf32, #tpu.memory_space<vmem>>, %arg9: memref<8x128xf32, #tpu.memory_space<vmem>>, %arg10: memref<64x128xf32, #tpu.memory_space<vmem>>) attributes {dimension_semantics = [#tpu.dimension_semantics<arbitrary>], iteration_bounds = array<i64: 1>, scalar_prefetch = 0 : i64, scratch_operands = 3 : i64, tpu.core_type = #tpu.core_type<tc>, window_params = [{transform_indices = @transform_0, window_bounds = array<i64: 64, 16>}, {pipeline_mode = #tpu.pipeline_mode<synchronous>, transform_indices = @transform_1, window_bounds = array<i64: 16, 512>}, {pipeline_mode = #tpu.pipeline_mode<synchronous>, transform_indices = @transform_2, window_bounds = array<i64: 128, 512>}, {pipeline_mode = #tpu.pipeline_mode<synchronous>, transform_indices = @transform_3, window_bounds = array<i64: 1, 512>}, {pipeline_mode = #tpu.pipeline_mode<synchronous>, transform_indices = @transform_4, window_bounds = array<i64: 128, 128>}, {pipeline_mode = #tpu.pipeline_mode<synchronous>, transform_indices = @transform_5, window_bounds = array<i64: 1, 128>}, {transform_indices = @transform_6, window_bounds = array<i64: 64, 128>}]} {
    %c0_i32 = arith.constant 0 : i32
    %0 = arith.cmpi eq, %arg0, %c0_i32 : i32
    %1 = arith.extui %0 : i1 to i32
    %c0_i32_0 = arith.constant 0 : i32
    %2 = arith.cmpi ne, %1, %c0_i32_0 : i32
    scf.if %2 {
      %cst_68 = arith.constant 0.000000e+00 : f32
      %263 = vector.broadcast %cst_68 : f32 to vector<8x128xf32>
      %c0_69 = arith.constant 0 : index
      %c0_70 = arith.constant 0 : index
      %264 = vector.load %arg8[%c0_69, %c0_70] : memref<8x128xf32, #tpu.memory_space<vmem>>, vector<8x128xf32>
      tpu.vector_store %arg8[%c0_69, %c0_70], %263 {strides = array<i32>} : memref<8x128xf32, #tpu.memory_space<vmem>>, vector<8x128xf32>,
      %cst_71 = arith.constant 0.000000e+00 : f32
      %265 = vector.broadcast %cst_71 : f32 to vector<8x128xf32>
      %c0_72 = arith.constant 0 : index
      %c0_73 = arith.constant 0 : index
      %266 = vector.load %arg9[%c0_72, %c0_73] : memref<8x128xf32, #tpu.memory_space<vmem>>, vector<8x128xf32>
      tpu.vector_store %arg9[%c0_72, %c0_73], %265 {strides = array<i32>} : memref<8x128xf32, #tpu.memory_space<vmem>>, vector<8x128xf32>,
    } else {
    }
    %c0 = arith.constant 0 : index
    %c0_1 = arith.constant 0 : index
    %3 = vector.load %arg1[%c0, %c0_1] : memref<64x16xf32, #tpu.memory_space<vmem>>, vector<64x16xf32>
    %c0_2 = arith.constant 0 : index
    %c0_3 = arith.constant 0 : index
    %4 = vector.load %arg2[%c0_2, %c0_3] : memref<16x512xf32, #tpu.memory_space<vmem>>, vector<16x512xf32>
    %cst = arith.constant dense<0.000000e+00> : vector<64x512xf32>
    %5 = tpu.matmul %3, %4, %cst {dimension_numbers = #tpu.dot_dimension_numbers<[1], [0], [0], [1], [0, 0, 1, 1], [], []>} : vector<64x16xf32>, vector<16x512xf32>, vector<64x512xf32> -> vector<64x512xf32>
    %c0_4 = arith.constant 0 : index
    %c0_5 = arith.constant 0 : index
    %6 = vector.load %arg4[%c0_4, %c0_5] : memref<1x512xf32, #tpu.memory_space<vmem>>, vector<1x512xf32>
    %7 = vector.broadcast %6 : vector<1x512xf32> to vector<64x512xf32>
    %8 = arith.addf %5, %7 : vector<64x512xf32>
    %c0_6 = arith.constant 0 : index
    %c0_7 = arith.constant 0 : index
    %9 = vector.load %arg3[%c0_6, %c0_7] : memref<128x512xf32, #tpu.memory_space<vmem>>, vector<128x512xf32>
    %c0_8 = arith.constant 0 : index
    %c0_9 = arith.constant 0 : index
    %10 = vector.load %arg8[%c0_8, %c0_9] : memref<8x128xf32, #tpu.memory_space<vmem>>, vector<8x128xf32>
    %c0_10 = arith.constant 0 : index
    %c0_11 = arith.constant 0 : index
    %11 = vector.load %arg9[%c0_10, %c0_11] : memref<8x128xf32, #tpu.memory_space<vmem>>, vector<8x128xf32>
    %12 = vector.extract_strided_slice %8 {offsets = [0, 0], sizes = [8, 512], strides = [1, 1]} : vector<64x512xf32> to vector<8x512xf32>
    %cst_12 = arith.constant dense<0.000000e+00> : vector<8x512xf32>
    %13 = tpu.matmul %10, %9, %cst_12 {dimension_numbers = #tpu.dot_dimension_numbers<[1], [0], [0], [1], [0, 0, 1, 1], [], []>} : vector<8x128xf32>, vector<128x512xf32>, vector<8x512xf32> -> vector<8x512xf32>
    %14 = arith.addf %12, %13 : vector<8x512xf32>
    %15 = vector.extract_strided_slice %14 {offsets = [0, 0], sizes = [8, 128], strides = [1, 1]} : vector<8x512xf32> to vector<8x128xf32>
    %16 = arith.negf %15 : vector<8x128xf32>
    %17 = math.exp %16 : vector<8x128xf32>
    %cst_13 = arith.constant 1.000000e+00 : f32
    %18 = vector.broadcast %cst_13 : f32 to vector<8x128xf32>
    %19 = arith.addf %18, %17 : vector<8x128xf32>
    %20 = arith.divf %18, %19 : vector<8x128xf32>
    %21 = vector.extract_strided_slice %14 {offsets = [0, 128], sizes = [8, 128], strides = [1, 1]} : vector<8x512xf32> to vector<8x128xf32>
    %22 = arith.negf %21 : vector<8x128xf32>
    %23 = math.exp %22 : vector<8x128xf32>
    %cst_14 = arith.constant 1.000000e+00 : f32
    %24 = vector.broadcast %cst_14 : f32 to vector<8x128xf32>
    %25 = arith.addf %24, %23 : vector<8x128xf32>
    %26 = arith.divf %24, %25 : vector<8x128xf32>
    %27 = vector.extract_strided_slice %14 {offsets = [0, 256], sizes = [8, 128], strides = [1, 1]} : vector<8x512xf32> to vector<8x128xf32>
    %28 = math.tanh %27 : vector<8x128xf32>
    %29 = vector.extract_strided_slice %14 {offsets = [0, 384], sizes = [8, 128], strides = [1, 1]} : vector<8x512xf32> to vector<8x128xf32>
    %30 = arith.negf %29 : vector<8x128xf32>
    %31 = math.exp %30 : vector<8x128xf32>
    %cst_15 = arith.constant 1.000000e+00 : f32
    %32 = vector.broadcast %cst_15 : f32 to vector<8x128xf32>
    %33 = arith.addf %32, %31 : vector<8x128xf32>
    %34 = arith.divf %32, %33 : vector<8x128xf32>
    %35 = arith.mulf %26, %11 : vector<8x128xf32>
    %36 = arith.mulf %20, %28 : vector<8x128xf32>
    %37 = arith.addf %35, %36 : vector<8x128xf32>
    %38 = math.tanh %37 : vector<8x128xf32>
    %39 = arith.mulf %34, %38 : vector<8x128xf32>
    %c0_16 = arith.constant 0 : index
    %c0_17 = arith.constant 0 : index
    %40 = vector.load %arg10[%c0_16, %c0_17] : memref<64x128xf32, #tpu.memory_space<vmem>>, vector<8x128xf32>
    tpu.vector_store %arg10[%c0_16, %c0_17], %39 {strides = array<i32>} : memref<64x128xf32, #tpu.memory_space<vmem>>, vector<8x128xf32>,
    %41 = vector.extract_strided_slice %8 {offsets = [8, 0], sizes = [8, 512], strides = [1, 1]} : vector<64x512xf32> to vector<8x512xf32>
    %cst_18 = arith.constant dense<0.000000e+00> : vector<8x512xf32>
    %42 = tpu.matmul %39, %9, %cst_18 {dimension_numbers = #tpu.dot_dimension_numbers<[1], [0], [0], [1], [0, 0, 1, 1], [], []>} : vector<8x128xf32>, vector<128x512xf32>, vector<8x512xf32> -> vector<8x512xf32>
    %43 = arith.addf %41, %42 : vector<8x512xf32>
    %44 = vector.extract_strided_slice %43 {offsets = [0, 0], sizes = [8, 128], strides = [1, 1]} : vector<8x512xf32> to vector<8x128xf32>
    %45 = arith.negf %44 : vector<8x128xf32>
    %46 = math.exp %45 : vector<8x128xf32>
    %cst_19 = arith.constant 1.000000e+00 : f32
    %47 = vector.broadcast %cst_19 : f32 to vector<8x128xf32>
    %48 = arith.addf %47, %46 : vector<8x128xf32>
    %49 = arith.divf %47, %48 : vector<8x128xf32>
    %50 = vector.extract_strided_slice %43 {offsets = [0, 128], sizes = [8, 128], strides = [1, 1]} : vector<8x512xf32> to vector<8x128xf32>
    %51 = arith.negf %50 : vector<8x128xf32>
    %52 = math.exp %51 : vector<8x128xf32>
    %cst_20 = arith.constant 1.000000e+00 : f32
    %53 = vector.broadcast %cst_20 : f32 to vector<8x128xf32>
    %54 = arith.addf %53, %52 : vector<8x128xf32>
    %55 = arith.divf %53, %54 : vector<8x128xf32>
    %56 = vector.extract_strided_slice %43 {offsets = [0, 256], sizes = [8, 128], strides = [1, 1]} : vector<8x512xf32> to vector<8x128xf32>
    %57 = math.tanh %56 : vector<8x128xf32>
    %58 = vector.extract_strided_slice %43 {offsets = [0, 384], sizes = [8, 128], strides = [1, 1]} : vector<8x512xf32> to vector<8x128xf32>
    %59 = arith.negf %58 : vector<8x128xf32>
    %60 = math.exp %59 : vector<8x128xf32>
    %cst_21 = arith.constant 1.000000e+00 : f32
    %61 = vector.broadcast %cst_21 : f32 to vector<8x128xf32>
    %62 = arith.addf %61, %60 : vector<8x128xf32>
    %63 = arith.divf %61, %62 : vector<8x128xf32>
    %64 = arith.mulf %55, %37 : vector<8x128xf32>
    %65 = arith.mulf %49, %57 : vector<8x128xf32>
    %66 = arith.addf %64, %65 : vector<8x128xf32>
    %67 = math.tanh %66 : vector<8x128xf32>
    %68 = arith.mulf %63, %67 : vector<8x128xf32>
    %c8 = arith.constant 8 : index
    %c0_22 = arith.constant 0 : index
    %69 = vector.load %arg10[%c8, %c0_22] : memref<64x128xf32, #tpu.memory_space<vmem>>, vector<8x128xf32>
    tpu.vector_store %arg10[%c8, %c0_22], %68 {strides = array<i32>} : memref<64x128xf32, #tpu.memory_space<vmem>>, vector<8x128xf32>,
    %70 = vector.extract_strided_slice %8 {offsets = [16, 0], sizes = [8, 512], strides = [1, 1]} : vector<64x512xf32> to vector<8x512xf32>
    %cst_23 = arith.constant dense<0.000000e+00> : vector<8x512xf32>
    %71 = tpu.matmul %68, %9, %cst_23 {dimension_numbers = #tpu.dot_dimension_numbers<[1], [0], [0], [1], [0, 0, 1, 1], [], []>} : vector<8x128xf32>, vector<128x512xf32>, vector<8x512xf32> -> vector<8x512xf32>
    %72 = arith.addf %70, %71 : vector<8x512xf32>
    %73 = vector.extract_strided_slice %72 {offsets = [0, 0], sizes = [8, 128], strides = [1, 1]} : vector<8x512xf32> to vector<8x128xf32>
    %74 = arith.negf %73 : vector<8x128xf32>
    %75 = math.exp %74 : vector<8x128xf32>
    %cst_24 = arith.constant 1.000000e+00 : f32
    %76 = vector.broadcast %cst_24 : f32 to vector<8x128xf32>
    %77 = arith.addf %76, %75 : vector<8x128xf32>
    %78 = arith.divf %76, %77 : vector<8x128xf32>
    %79 = vector.extract_strided_slice %72 {offsets = [0, 128], sizes = [8, 128], strides = [1, 1]} : vector<8x512xf32> to vector<8x128xf32>
    %80 = arith.negf %79 : vector<8x128xf32>
    %81 = math.exp %80 : vector<8x128xf32>
    %cst_25 = arith.constant 1.000000e+00 : f32
    %82 = vector.broadcast %cst_25 : f32 to vector<8x128xf32>
    %83 = arith.addf %82, %81 : vector<8x128xf32>
    %84 = arith.divf %82, %83 : vector<8x128xf32>
    %85 = vector.extract_strided_slice %72 {offsets = [0, 256], sizes = [8, 128], strides = [1, 1]} : vector<8x512xf32> to vector<8x128xf32>
    %86 = math.tanh %85 : vector<8x128xf32>
    %87 = vector.extract_strided_slice %72 {offsets = [0, 384], sizes = [8, 128], strides = [1, 1]} : vector<8x512xf32> to vector<8x128xf32>
    %88 = arith.negf %87 : vector<8x128xf32>
    %89 = math.exp %88 : vector<8x128xf32>
    %cst_26 = arith.constant 1.000000e+00 : f32
    %90 = vector.broadcast %cst_26 : f32 to vector<8x128xf32>
    %91 = arith.addf %90, %89 : vector<8x128xf32>
    %92 = arith.divf %90, %91 : vector<8x128xf32>
    %93 = arith.mulf %84, %66 : vector<8x128xf32>
    %94 = arith.mulf %78, %86 : vector<8x128xf32>
    %95 = arith.addf %93, %94 : vector<8x128xf32>
    %96 = math.tanh %95 : vector<8x128xf32>
    %97 = arith.mulf %92, %96 : vector<8x128xf32>
    %c16 = arith.constant 16 : index
    %c0_27 = arith.constant 0 : index
    %98 = vector.load %arg10[%c16, %c0_27] : memref<64x128xf32, #tpu.memory_space<vmem>>, vector<8x128xf32>
    tpu.vector_store %arg10[%c16, %c0_27], %97 {strides = array<i32>} : memref<64x128xf32, #tpu.memory_space<vmem>>, vector<8x128xf32>,
    %99 = vector.extract_strided_slice %8 {offsets = [24, 0], sizes = [8, 512], strides = [1, 1]} : vector<64x512xf32> to vector<8x512xf32>
    %cst_28 = arith.constant dense<0.000000e+00> : vector<8x512xf32>
    %100 = tpu.matmul %97, %9, %cst_28 {dimension_numbers = #tpu.dot_dimension_numbers<[1], [0], [0], [1], [0, 0, 1, 1], [], []>} : vector<8x128xf32>, vector<128x512xf32>, vector<8x512xf32> -> vector<8x512xf32>
    %101 = arith.addf %99, %100 : vector<8x512xf32>
    %102 = vector.extract_strided_slice %101 {offsets = [0, 0], sizes = [8, 128], strides = [1, 1]} : vector<8x512xf32> to vector<8x128xf32>
    %103 = arith.negf %102 : vector<8x128xf32>
    %104 = math.exp %103 : vector<8x128xf32>
    %cst_29 = arith.constant 1.000000e+00 : f32
    %105 = vector.broadcast %cst_29 : f32 to vector<8x128xf32>
    %106 = arith.addf %105, %104 : vector<8x128xf32>
    %107 = arith.divf %105, %106 : vector<8x128xf32>
    %108 = vector.extract_strided_slice %101 {offsets = [0, 128], sizes = [8, 128], strides = [1, 1]} : vector<8x512xf32> to vector<8x128xf32>
    %109 = arith.negf %108 : vector<8x128xf32>
    %110 = math.exp %109 : vector<8x128xf32>
    %cst_30 = arith.constant 1.000000e+00 : f32
    %111 = vector.broadcast %cst_30 : f32 to vector<8x128xf32>
    %112 = arith.addf %111, %110 : vector<8x128xf32>
    %113 = arith.divf %111, %112 : vector<8x128xf32>
    %114 = vector.extract_strided_slice %101 {offsets = [0, 256], sizes = [8, 128], strides = [1, 1]} : vector<8x512xf32> to vector<8x128xf32>
    %115 = math.tanh %114 : vector<8x128xf32>
    %116 = vector.extract_strided_slice %101 {offsets = [0, 384], sizes = [8, 128], strides = [1, 1]} : vector<8x512xf32> to vector<8x128xf32>
    %117 = arith.negf %116 : vector<8x128xf32>
    %118 = math.exp %117 : vector<8x128xf32>
    %cst_31 = arith.constant 1.000000e+00 : f32
    %119 = vector.broadcast %cst_31 : f32 to vector<8x128xf32>
    %120 = arith.addf %119, %118 : vector<8x128xf32>
    %121 = arith.divf %119, %120 : vector<8x128xf32>
    %122 = arith.mulf %113, %95 : vector<8x128xf32>
    %123 = arith.mulf %107, %115 : vector<8x128xf32>
    %124 = arith.addf %122, %123 : vector<8x128xf32>
    %125 = math.tanh %124 : vector<8x128xf32>
    %126 = arith.mulf %121, %125 : vector<8x128xf32>
    %c24 = arith.constant 24 : index
    %c0_32 = arith.constant 0 : index
    %127 = vector.load %arg10[%c24, %c0_32] : memref<64x128xf32, #tpu.memory_space<vmem>>, vector<8x128xf32>
    tpu.vector_store %arg10[%c24, %c0_32], %126 {strides = array<i32>} : memref<64x128xf32, #tpu.memory_space<vmem>>, vector<8x128xf32>,
    %128 = vector.extract_strided_slice %8 {offsets = [32, 0], sizes = [8, 512], strides = [1, 1]} : vector<64x512xf32> to vector<8x512xf32>
    %cst_33 = arith.constant dense<0.000000e+00> : vector<8x512xf32>
    %129 = tpu.matmul %126, %9, %cst_33 {dimension_numbers = #tpu.dot_dimension_numbers<[1], [0], [0], [1], [0, 0, 1, 1], [], []>} : vector<8x128xf32>, vector<128x512xf32>, vector<8x512xf32> -> vector<8x512xf32>
    %130 = arith.addf %128, %129 : vector<8x512xf32>
    %131 = vector.extract_strided_slice %130 {offsets = [0, 0], sizes = [8, 128], strides = [1, 1]} : vector<8x512xf32> to vector<8x128xf32>
    %132 = arith.negf %131 : vector<8x128xf32>
    %133 = math.exp %132 : vector<8x128xf32>
    %cst_34 = arith.constant 1.000000e+00 : f32
    %134 = vector.broadcast %cst_34 : f32 to vector<8x128xf32>
    %135 = arith.addf %134, %133 : vector<8x128xf32>
    %136 = arith.divf %134, %135 : vector<8x128xf32>
    %137 = vector.extract_strided_slice %130 {offsets = [0, 128], sizes = [8, 128], strides = [1, 1]} : vector<8x512xf32> to vector<8x128xf32>
    %138 = arith.negf %137 : vector<8x128xf32>
    %139 = math.exp %138 : vector<8x128xf32>
    %cst_35 = arith.constant 1.000000e+00 : f32
    %140 = vector.broadcast %cst_35 : f32 to vector<8x128xf32>
    %141 = arith.addf %140, %139 : vector<8x128xf32>
    %142 = arith.divf %140, %141 : vector<8x128xf32>
    %143 = vector.extract_strided_slice %130 {offsets = [0, 256], sizes = [8, 128], strides = [1, 1]} : vector<8x512xf32> to vector<8x128xf32>
    %144 = math.tanh %143 : vector<8x128xf32>
    %145 = vector.extract_strided_slice %130 {offsets = [0, 384], sizes = [8, 128], strides = [1, 1]} : vector<8x512xf32> to vector<8x128xf32>
    %146 = arith.negf %145 : vector<8x128xf32>
    %147 = math.exp %146 : vector<8x128xf32>
    %cst_36 = arith.constant 1.000000e+00 : f32
    %148 = vector.broadcast %cst_36 : f32 to vector<8x128xf32>
    %149 = arith.addf %148, %147 : vector<8x128xf32>
    %150 = arith.divf %148, %149 : vector<8x128xf32>
    %151 = arith.mulf %142, %124 : vector<8x128xf32>
    %152 = arith.mulf %136, %144 : vector<8x128xf32>
    %153 = arith.addf %151, %152 : vector<8x128xf32>
    %154 = math.tanh %153 : vector<8x128xf32>
    %155 = arith.mulf %150, %154 : vector<8x128xf32>
    %c32 = arith.constant 32 : index
    %c0_37 = arith.constant 0 : index
    %156 = vector.load %arg10[%c32, %c0_37] : memref<64x128xf32, #tpu.memory_space<vmem>>, vector<8x128xf32>
    tpu.vector_store %arg10[%c32, %c0_37], %155 {strides = array<i32>} : memref<64x128xf32, #tpu.memory_space<vmem>>, vector<8x128xf32>,
    %157 = vector.extract_strided_slice %8 {offsets = [40, 0], sizes = [8, 512], strides = [1, 1]} : vector<64x512xf32> to vector<8x512xf32>
    %cst_38 = arith.constant dense<0.000000e+00> : vector<8x512xf32>
    %158 = tpu.matmul %155, %9, %cst_38 {dimension_numbers = #tpu.dot_dimension_numbers<[1], [0], [0], [1], [0, 0, 1, 1], [], []>} : vector<8x128xf32>, vector<128x512xf32>, vector<8x512xf32> -> vector<8x512xf32>
    %159 = arith.addf %157, %158 : vector<8x512xf32>
    %160 = vector.extract_strided_slice %159 {offsets = [0, 0], sizes = [8, 128], strides = [1, 1]} : vector<8x512xf32> to vector<8x128xf32>
    %161 = arith.negf %160 : vector<8x128xf32>
    %162 = math.exp %161 : vector<8x128xf32>
    %cst_39 = arith.constant 1.000000e+00 : f32
    %163 = vector.broadcast %cst_39 : f32 to vector<8x128xf32>
    %164 = arith.addf %163, %162 : vector<8x128xf32>
    %165 = arith.divf %163, %164 : vector<8x128xf32>
    %166 = vector.extract_strided_slice %159 {offsets = [0, 128], sizes = [8, 128], strides = [1, 1]} : vector<8x512xf32> to vector<8x128xf32>
    %167 = arith.negf %166 : vector<8x128xf32>
    %168 = math.exp %167 : vector<8x128xf32>
    %cst_40 = arith.constant 1.000000e+00 : f32
    %169 = vector.broadcast %cst_40 : f32 to vector<8x128xf32>
    %170 = arith.addf %169, %168 : vector<8x128xf32>
    %171 = arith.divf %169, %170 : vector<8x128xf32>
    %172 = vector.extract_strided_slice %159 {offsets = [0, 256], sizes = [8, 128], strides = [1, 1]} : vector<8x512xf32> to vector<8x128xf32>
    %173 = math.tanh %172 : vector<8x128xf32>
    %174 = vector.extract_strided_slice %159 {offsets = [0, 384], sizes = [8, 128], strides = [1, 1]} : vector<8x512xf32> to vector<8x128xf32>
    %175 = arith.negf %174 : vector<8x128xf32>
    %176 = math.exp %175 : vector<8x128xf32>
    %cst_41 = arith.constant 1.000000e+00 : f32
    %177 = vector.broadcast %cst_41 : f32 to vector<8x128xf32>
    %178 = arith.addf %177, %176 : vector<8x128xf32>
    %179 = arith.divf %177, %178 : vector<8x128xf32>
    %180 = arith.mulf %171, %153 : vector<8x128xf32>
    %181 = arith.mulf %165, %173 : vector<8x128xf32>
    %182 = arith.addf %180, %181 : vector<8x128xf32>
    %183 = math.tanh %182 : vector<8x128xf32>
    %184 = arith.mulf %179, %183 : vector<8x128xf32>
    %c40 = arith.constant 40 : index
    %c0_42 = arith.constant 0 : index
    %185 = vector.load %arg10[%c40, %c0_42] : memref<64x128xf32, #tpu.memory_space<vmem>>, vector<8x128xf32>
    tpu.vector_store %arg10[%c40, %c0_42], %184 {strides = array<i32>} : memref<64x128xf32, #tpu.memory_space<vmem>>, vector<8x128xf32>,
    %186 = vector.extract_strided_slice %8 {offsets = [48, 0], sizes = [8, 512], strides = [1, 1]} : vector<64x512xf32> to vector<8x512xf32>
    %cst_43 = arith.constant dense<0.000000e+00> : vector<8x512xf32>
    %187 = tpu.matmul %184, %9, %cst_43 {dimension_numbers = #tpu.dot_dimension_numbers<[1], [0], [0], [1], [0, 0, 1, 1], [], []>} : vector<8x128xf32>, vector<128x512xf32>, vector<8x512xf32> -> vector<8x512xf32>
    %188 = arith.addf %186, %187 : vector<8x512xf32>
    %189 = vector.extract_strided_slice %188 {offsets = [0, 0], sizes = [8, 128], strides = [1, 1]} : vector<8x512xf32> to vector<8x128xf32>
    %190 = arith.negf %189 : vector<8x128xf32>
    %191 = math.exp %190 : vector<8x128xf32>
    %cst_44 = arith.constant 1.000000e+00 : f32
    %192 = vector.broadcast %cst_44 : f32 to vector<8x128xf32>
    %193 = arith.addf %192, %191 : vector<8x128xf32>
    %194 = arith.divf %192, %193 : vector<8x128xf32>
    %195 = vector.extract_strided_slice %188 {offsets = [0, 128], sizes = [8, 128], strides = [1, 1]} : vector<8x512xf32> to vector<8x128xf32>
    %196 = arith.negf %195 : vector<8x128xf32>
    %197 = math.exp %196 : vector<8x128xf32>
    %cst_45 = arith.constant 1.000000e+00 : f32
    %198 = vector.broadcast %cst_45 : f32 to vector<8x128xf32>
    %199 = arith.addf %198, %197 : vector<8x128xf32>
    %200 = arith.divf %198, %199 : vector<8x128xf32>
    %201 = vector.extract_strided_slice %188 {offsets = [0, 256], sizes = [8, 128], strides = [1, 1]} : vector<8x512xf32> to vector<8x128xf32>
    %202 = math.tanh %201 : vector<8x128xf32>
    %203 = vector.extract_strided_slice %188 {offsets = [0, 384], sizes = [8, 128], strides = [1, 1]} : vector<8x512xf32> to vector<8x128xf32>
    %204 = arith.negf %203 : vector<8x128xf32>
    %205 = math.exp %204 : vector<8x128xf32>
    %cst_46 = arith.constant 1.000000e+00 : f32
    %206 = vector.broadcast %cst_46 : f32 to vector<8x128xf32>
    %207 = arith.addf %206, %205 : vector<8x128xf32>
    %208 = arith.divf %206, %207 : vector<8x128xf32>
    %209 = arith.mulf %200, %182 : vector<8x128xf32>
    %210 = arith.mulf %194, %202 : vector<8x128xf32>
    %211 = arith.addf %209, %210 : vector<8x128xf32>
    %212 = math.tanh %211 : vector<8x128xf32>
    %213 = arith.mulf %208, %212 : vector<8x128xf32>
    %c48 = arith.constant 48 : index
    %c0_47 = arith.constant 0 : index
    %214 = vector.load %arg10[%c48, %c0_47] : memref<64x128xf32, #tpu.memory_space<vmem>>, vector<8x128xf32>
    tpu.vector_store %arg10[%c48, %c0_47], %213 {strides = array<i32>} : memref<64x128xf32, #tpu.memory_space<vmem>>, vector<8x128xf32>,
    %215 = vector.extract_strided_slice %8 {offsets = [56, 0], sizes = [8, 512], strides = [1, 1]} : vector<64x512xf32> to vector<8x512xf32>
    %cst_48 = arith.constant dense<0.000000e+00> : vector<8x512xf32>
    %216 = tpu.matmul %213, %9, %cst_48 {dimension_numbers = #tpu.dot_dimension_numbers<[1], [0], [0], [1], [0, 0, 1, 1], [], []>} : vector<8x128xf32>, vector<128x512xf32>, vector<8x512xf32> -> vector<8x512xf32>
    %217 = arith.addf %215, %216 : vector<8x512xf32>
    %218 = vector.extract_strided_slice %217 {offsets = [0, 0], sizes = [8, 128], strides = [1, 1]} : vector<8x512xf32> to vector<8x128xf32>
    %219 = arith.negf %218 : vector<8x128xf32>
    %220 = math.exp %219 : vector<8x128xf32>
    %cst_49 = arith.constant 1.000000e+00 : f32
    %221 = vector.broadcast %cst_49 : f32 to vector<8x128xf32>
    %222 = arith.addf %221, %220 : vector<8x128xf32>
    %223 = arith.divf %221, %222 : vector<8x128xf32>
    %224 = vector.extract_strided_slice %217 {offsets = [0, 128], sizes = [8, 128], strides = [1, 1]} : vector<8x512xf32> to vector<8x128xf32>
    %225 = arith.negf %224 : vector<8x128xf32>
    %226 = math.exp %225 : vector<8x128xf32>
    %cst_50 = arith.constant 1.000000e+00 : f32
    %227 = vector.broadcast %cst_50 : f32 to vector<8x128xf32>
    %228 = arith.addf %227, %226 : vector<8x128xf32>
    %229 = arith.divf %227, %228 : vector<8x128xf32>
    %230 = vector.extract_strided_slice %217 {offsets = [0, 256], sizes = [8, 128], strides = [1, 1]} : vector<8x512xf32> to vector<8x128xf32>
    %231 = math.tanh %230 : vector<8x128xf32>
    %232 = vector.extract_strided_slice %217 {offsets = [0, 384], sizes = [8, 128], strides = [1, 1]} : vector<8x512xf32> to vector<8x128xf32>
    %233 = arith.negf %232 : vector<8x128xf32>
    %234 = math.exp %233 : vector<8x128xf32>
    %cst_51 = arith.constant 1.000000e+00 : f32
    %235 = vector.broadcast %cst_51 : f32 to vector<8x128xf32>
    %236 = arith.addf %235, %234 : vector<8x128xf32>
    %237 = arith.divf %235, %236 : vector<8x128xf32>
    %238 = arith.mulf %229, %211 : vector<8x128xf32>
    %239 = arith.mulf %223, %231 : vector<8x128xf32>
    %240 = arith.addf %238, %239 : vector<8x128xf32>
    %241 = math.tanh %240 : vector<8x128xf32>
    %242 = arith.mulf %237, %241 : vector<8x128xf32>
    %c56 = arith.constant 56 : index
    %c0_52 = arith.constant 0 : index
    %243 = vector.load %arg10[%c56, %c0_52] : memref<64x128xf32, #tpu.memory_space<vmem>>, vector<8x128xf32>
    tpu.vector_store %arg10[%c56, %c0_52], %242 {strides = array<i32>} : memref<64x128xf32, #tpu.memory_space<vmem>>, vector<8x128xf32>,
    %c0_53 = arith.constant 0 : index
    %c0_54 = arith.constant 0 : index
    %244 = vector.load %arg8[%c0_53, %c0_54] : memref<8x128xf32, #tpu.memory_space<vmem>>, vector<8x128xf32>
    tpu.vector_store %arg8[%c0_53, %c0_54], %242 {strides = array<i32>} : memref<8x128xf32, #tpu.memory_space<vmem>>, vector<8x128xf32>,
    %c0_55 = arith.constant 0 : index
    %c0_56 = arith.constant 0 : index
    %245 = vector.load %arg9[%c0_55, %c0_56] : memref<8x128xf32, #tpu.memory_space<vmem>>, vector<8x128xf32>
    tpu.vector_store %arg9[%c0_55, %c0_56], %240 {strides = array<i32>} : memref<8x128xf32, #tpu.memory_space<vmem>>, vector<8x128xf32>,
    %c0_57 = arith.constant 0 : index
    %c0_58 = arith.constant 0 : index
    %246 = vector.load %arg10[%c0_57, %c0_58] : memref<64x128xf32, #tpu.memory_space<vmem>>, vector<64x128xf32>
    %c0_59 = arith.constant 0 : index
    %c0_60 = arith.constant 0 : index
    %247 = vector.load %arg5[%c0_59, %c0_60] : memref<128x128xf32, #tpu.memory_space<vmem>>, vector<128x128xf32>
    %cst_61 = arith.constant dense<0.000000e+00> : vector<64x128xf32>
    %248 = tpu.matmul %246, %247, %cst_61 {dimension_numbers = #tpu.dot_dimension_numbers<[1], [0], [0], [1], [0, 0, 1, 1], [], []>} : vector<64x128xf32>, vector<128x128xf32>, vector<64x128xf32> -> vector<64x128xf32>
    %c0_62 = arith.constant 0 : index
    %c0_63 = arith.constant 0 : index
    %249 = vector.load %arg6[%c0_62, %c0_63] : memref<1x128xf32, #tpu.memory_space<vmem>>, vector<1x128xf32>
    %250 = vector.broadcast %249 : vector<1x128xf32> to vector<64x128xf32>
    %251 = arith.addf %248, %250 : vector<64x128xf32>
    %cst_64 = arith.constant dense<0xFF800000> : vector<64xf32>
    %252 = vector.multi_reduction <maximumf>, %251, %cst_64 [1] : vector<64x128xf32> to vector<64xf32>
    %253 = vector.shape_cast %252 : vector<64xf32> to vector<64x1xf32>
    %254 = vector.broadcast %253 : vector<64x1xf32> to vector<64x128xf32>
    %255 = arith.subf %251, %254 : vector<64x128xf32>
    %256 = math.exp %255 : vector<64x128xf32>
    %cst_65 = arith.constant dense<0.000000e+00> : vector<64xf32>
    %257 = vector.multi_reduction <add>, %256, %cst_65 [1] : vector<64x128xf32> to vector<64xf32>
    %258 = vector.shape_cast %257 : vector<64xf32> to vector<64x1xf32>
    %259 = math.log %258 : vector<64x1xf32>
    %260 = vector.broadcast %259 : vector<64x1xf32> to vector<64x128xf32>
    %261 = arith.subf %255, %260 : vector<64x128xf32>
    %c0_66 = arith.constant 0 : index
    %c0_67 = arith.constant 0 : index
    %262 = vector.load %arg7[%c0_66, %c0_67] : memref<64x128xf32, #tpu.memory_space<vmem>>, vector<64x128xf32>
    tpu.vector_store %arg7[%c0_66, %c0_67], %261 {strides = array<i32>} : memref<64x128xf32, #tpu.memory_space<vmem>>, vector<64x128xf32>,
    return
  }
  func.func @transform_0(%arg0: i32) -> (i32, i32) {
    %c0_i32 = arith.constant 0 : i32
    %c0_i32_0 = arith.constant 0 : i32
    return %arg0, %c0_i32 : i32, i32
  }
  func.func @transform_1(%arg0: i32) -> (i32, i32) {
    %c0_i32 = arith.constant 0 : i32
    %c0_i32_0 = arith.constant 0 : i32
    %c0_i32_1 = arith.constant 0 : i32
    return %c0_i32, %c0_i32_0 : i32, i32
  }
  func.func @transform_2(%arg0: i32) -> (i32, i32) {
    %c0_i32 = arith.constant 0 : i32
    %c0_i32_0 = arith.constant 0 : i32
    %c0_i32_1 = arith.constant 0 : i32
    return %c0_i32, %c0_i32_0 : i32, i32
  }
  func.func @transform_3(%arg0: i32) -> (i32, i32) {
    %c0_i32 = arith.constant 0 : i32
    %c0_i32_0 = arith.constant 0 : i32
    %c0_i32_1 = arith.constant 0 : i32
    return %c0_i32, %c0_i32_0 : i32, i32
  }
  func.func @transform_4(%arg0: i32) -> (i32, i32) {
    %c0_i32 = arith.constant 0 : i32
    %c0_i32_0 = arith.constant 0 : i32
    %c0_i32_1 = arith.constant 0 : i32
    return %c0_i32, %c0_i32_0 : i32, i32
  }
  func.func @transform_5(%arg0: i32) -> (i32, i32) {
    %c0_i32 = arith.constant 0 : i32
    %c0_i32_0 = arith.constant 0 : i32
    %c0_i32_1 = arith.constant 0 : i32
    return %c0_i32, %c0_i32_0 : i32, i32
  }
  func.func @transform_6(%arg0: i32) -> (i32, i32) {
    %c0_i32 = arith.constant 0 : i32
    %c0_i32_0 = arith.constant 0 : i32
    return %arg0, %c0_i32 : i32, i32
  }
}

</mosaic_0001>

<llo_original>
// kernel: morph_model_forward.1
$region0: #{morph_model_forward.1}
  #allocation0 [shape = 'u32[]', space=smem, size = 0x4, offset = 0x4, fixed_abs, tag = 'smem constant byte address 0x4 - core index']
  #allocation1 [shape = 'u32[144,128]{1,0:T(1,128)}', space=vmem, size = 0x12000, scoped, tag = 'internal scratch']
  #allocation2 [shape = 'f32[8,128]{1,0:T(8,128)}', space=vmem, size = 0x1000, scoped, tag = 'scratch operand']
  #allocation3 [shape = 'f32[8,128]{1,0:T(8,128)}', space=vmem, size = 0x1000, scoped, tag = 'scratch operand']
  #allocation4 [shape = 'f32[64,128]{1,0:T(8,128)}', space=vmem, size = 0x8000, scoped, tag = 'scratch operand']
  %s0 = inlined_call_operand.vmem [shape: f32[64,16], index: 0, kind: input, shape index: {}]
  %s1 = inlined_call_operand.vmem [shape: f32[16,512], index: 1, kind: input, shape index: {}]
  %s2 = inlined_call_operand.vmem [shape: f32[128,512], index: 2, kind: input, shape index: {}]
  %s3 = inlined_call_operand.vmem [shape: f32[1,512], index: 3, kind: input, shape index: {}]
  %s4 = inlined_call_operand.vmem [shape: f32[128,128], index: 4, kind: input, shape index: {}]
  %s5 = inlined_call_operand.vmem [shape: f32[1,128], index: 5, kind: input, shape index: {}]
  %s6 = inlined_call_operand.vmem [shape: f32[64,128], index: 6, kind: output, shape index: {}]
  %s7 = sld [smem:[#allocation0]]
  $region38: #{morph_model_forward.1} parent=0
    _
  %s9 = ssub.s32 1, %s7
  %s10 = scalar_select 0, %s9, %s7
  // Predicated region
  $region2: #{morph_model_forward.1} parent=0 // pred_check
    _
  $region3: #{morph_model_forward.1} parent=0 // pred_check_branch
    %12 = sbr.rel (0) target = $region5
  $region4: #{morph_model_forward.1} parent=0 // pred_region
    _
  $region5: #{morph_model_forward.1} parent=0 // pred_fallthru
    _
  // Predicated region
  $region6: #{morph_model_forward.1} parent=0 // pred_check
    _
  $region7: #{morph_model_forward.1} parent=0 // pred_check_branch
    %14 = sbr.rel (0) target = $region9
  $region8: #{morph_model_forward.1} parent=0 // pred_region
    _
  $region9: #{morph_model_forward.1} parent=0 // pred_fallthru
    _
  // Predicated region
  $region10: #{morph_model_forward.1} parent=0 // pred_check
    _
  $region11: #{morph_model_forward.1} parent=0 // pred_check_branch
    %16 = sbr.rel (0) target = $region13
  $region12: #{morph_model_forward.1} parent=0 // pred_region
    _
  $region13: #{morph_model_forward.1} parent=0 // pred_fallthru
    _
  // Predicated region
  $region14: #{morph_model_forward.1} parent=0 // pred_check
    _
  $region15: #{morph_model_forward.1} parent=0 // pred_check_branch
    %18 = sbr.rel (0) target = $region17
  $region16: #{morph_model_forward.1} parent=0 // pred_region
    _
  $region17: #{morph_model_forward.1} parent=0 // pred_fallthru
    _
  // Predicated region
  $region18: #{morph_model_forward.1} parent=0 // pred_check
    _
  $region19: #{morph_model_forward.1} parent=0 // pred_check_branch
    %20 = sbr.rel (0) target = $region21
  $region20: #{morph_model_forward.1} parent=0 // pred_region
    _
  $region21: #{morph_model_forward.1} parent=0 // pred_fallthru
    _
  // Predicated region
  $region22: #{morph_model_forward.1} parent=0 // pred_check
    _
  $region23: #{morph_model_forward.1} parent=0 // pred_check_branch
    %22 = sbr.rel (0) target = $region25
  $region24: #{morph_model_forward.1} parent=0 // pred_region
    _
  $region25: #{morph_model_forward.1} parent=0 // pred_fallthru
    _
  %p23 = scmp.eq.s32.totalorder 0, 0
  // Predicated region
  $region26: #{morph_model_forward.1} parent=0 // pred_check
    %p24 = pneg %p23
  $region27: #{morph_model_forward.1} parent=0 // pred_check_branch
    %26 = sbr.rel (%p24) target = $region29
  $region28: #{morph_model_forward.1} parent=0 // pred_region
    %27 = vst [vmem:[#allocation2] sm:$0xff] 0.0
    %28 = vst [vmem:[#allocation3] sm:$0xff] 0.0
  $region29: #{morph_model_forward.1} parent=0 // pred_fallthru
    _
  %v29 = vld [vmem:[%s0] sm:$0xff]
  %v30 = vld [vmem:[%s0 + $0x8] sm:$0xff]
  %v31 = vld [vmem:[%s0 + $0x10] sm:$0xff]
  %v32 = vld [vmem:[%s0 + $0x18] sm:$0xff]
  %v33 = vld [vmem:[%s0 + $0x20] sm:$0xff]
  %v34 = vld [vmem:[%s0 + $0x28] sm:$0xff]
  %v35 = vld [vmem:[%s0 + $0x30] sm:$0xff]
  %v36 = vld [vmem:[%s0 + $0x38] sm:$0xff]
  %v37 = vld [vmem:[%s1] sm:$0xff]
  %v38 = vld [vmem:[%s1 + $0x8] sm:$0xff]
  %v39 = vld [vmem:[%s1 + $0x10] sm:$0xff]
  %v40 = vld [vmem:[%s1 + $0x18] sm:$0xff]
  %v41 = vld [vmem:[%s1 + $0x20] sm:$0xff]
  %v42 = vld [vmem:[%s1 + $0x28] sm:$0xff]
  %v43 = vld [vmem:[%s1 + $0x30] sm:$0xff]
  %v44 = vld [vmem:[%s1 + $0x38] sm:$0xff]
  %v45 = vld [vmem:[%s3] sm:$0xf]
  %v47 = vlaneseq
  %v48 = vshrl.u32 %v47, 7
  %v49 = vsub.s32 0, %v48
  %v50 = vrot.slane %v45, %v49
  %v51 = vlaneseq
  %v52 = vshrl.u32 %v51, 7
  %v53 = vsub.s32 1, %v52
  %v54 = vrot.slane %v45, %v53
  %v55 = vlaneseq
  %v56 = vshrl.u32 %v55, 7
  %v57 = vsub.s32 2, %v56
  %v58 = vrot.slane %v45, %v57
  %v59 = vlaneseq
  %v60 = vshrl.u32 %v59, 7
  %v61 = vsub.s32 3, %v60
  %v62 = vrot.slane %v45, %v61
  %vm67 = vcmask 130048
  %v69 = vsel %vm67, %v29, 0
  %v72 = vsel %vm67, %v30, 0
  %v75 = vsel %vm67, %v31, 0
  %v78 = vsel %vm67, %v32, 0
  %v81 = vsel %vm67, %v33, 0
  %v84 = vsel %vm67, %v34, 0
  %v87 = vsel %vm67, %v35, 0
  %v90 = vsel %vm67, %v36, 0
  %92 = vmatprep.subr.mxu0 %v38
  %93 = vmatpush1.msra.mxu0 %v37
  %94 = vmatprep.subr.mxu0 %v42
  %95 = vmatpush1.msra.mxu0 %v41
  %96 = vmatprep.subr.mxu0 0.0
  %97 = vmatpush1.msra.mxu0 0.0
  %98 = vmatprep.subr.mxu0 0.0
  %99 = vmatpush1.msra.mxu0 0.0
  %100 = vmatprep.subr.mxu0 0.0
  %101 = vmatpush1.msra.mxu0 0.0
  %102 = vmatprep.subr.mxu0 0.0
  %103 = vmatpush1.msra.mxu0 0.0
  %104 = vmatprep.subr.mxu0 0.0
  %105 = vmatpush1.msra.mxu0 0.0
  %106 = vmatprep.subr.mxu0 0.0
  %107 = vmatpush1.msra.mxu0 0.0
  %108 = vmatprep.subr.mxu0 0.0
  %109 = vmatpush1.msra.mxu0 0.0
  %110 = vmatprep.subr.mxu0 0.0
  %111 = vmatpush1.msra.mxu0 0.0
  %112 = vmatprep.subr.mxu0 0.0
  %113 = vmatpush1.msra.mxu0 0.0
  %114 = vmatprep.subr.mxu0 0.0
  %115 = vmatpush1.msra.mxu0 0.0
  %116 = vmatprep.subr.mxu0 0.0
  %117 = vmatpush1.msra.mxu0 0.0
  %118 = vmatprep.subr.mxu0 0.0
  %119 = vmatpush1.msra.mxu0 0.0
  %120 = vmatprep.subr.mxu0 0.0
  %121 = vmatpush1.msra.mxu0 0.0
  %122 = vmatprep.subr.mxu0 0.0
  %123 = vmatpush1.msra.mxu0 0.0
  %124 = vmatprep.subr.mxu0 0.0
  %125 = vmatpush1.msra.mxu0 0.0
  %126 = vmatprep.subr.mxu0 0.0
  %127 = vmatpush1.msra.mxu0 0.0
  %128 = vmatprep.subr.mxu0 0.0
  %129 = vmatpush1.msra.mxu0 0.0
  %130 = vmatprep.subr.mxu0 0.0
  %131 = vmatpush1.msra.mxu0 0.0
  %132 = vmatprep.subr.mxu0 0.0
  %133 = vmatpush1.msra.mxu0 0.0
  %134 = vmatprep.subr.mxu0 0.0
  %135 = vmatpush1.msra.mxu0 0.0
  %136 = vmatprep.subr.mxu0 0.0
  %137 = vmatpush1.msra.mxu0 0.0
  %138 = vmatprep.subr.mxu0 0.0
  %139 = vmatpush1.msra.mxu0 0.0
  %140 = vmatprep.subr.mxu0 0.0
  %141 = vmatpush1.msra.mxu0 0.0
  %142 = vmatprep.subr.mxu0 0.0
  %143 = vmatpush1.msra.mxu0 0.0
  %144 = vmatprep.subr.mxu0 0.0
  %145 = vmatpush1.msra.mxu0 0.0
  %146 = vmatprep.subr.mxu0 0.0
  %147 = vmatpush1.msra.mxu0 0.0
  %148 = vmatprep.subr.mxu0 0.0
  %149 = vmatpush1.msra.mxu0 0.0
  %150 = vmatprep.subr.mxu0 0.0
  %151 = vmatpush1.msra.mxu0 0.0
  %152 = vmatprep.subr.mxu0 0.0
  %153 = vmatpush1.msra.mxu0 0.0
  %154 = vmatprep.subr.mxu0 0.0
  %155 = vmatpush1.msra.mxu0 0.0
  %156 = vmatprep.mubr.f32.mxu0 0.0
  %157 = vmatmul.mubr.f32.gmra.mrb[0].mxu0 %v69
  %v158 = vpop.f32.mrb[0].mxu0
  %v159 = vadd.f32 %v50, %v158
  %v160 = vpop.f32.mrb[0].mxu0
  %v161 = vadd.f32 %v54, %v160
  %162 = vmatprep.mubr.f32.mxu0 0.0
  %163 = vmatmul.mubr.f32.gmra.mrb[0].mxu0 %v72
  %v164 = vpop.f32.mrb[0].mxu0
  %v165 = vadd.f32 %v50, %v164
  %v166 = vpop.f32.mrb[0].mxu0
  %v167 = vadd.f32 %v54, %v166
  %168 = vmatprep.mubr.f32.mxu0 0.0
  %169 = vmatmul.mubr.f32.gmra.mrb[0].mxu0 %v75
  %v170 = vpop.f32.mrb[0].mxu0
  %v171 = vadd.f32 %v50, %v170
  %v172 = vpop.f32.mrb[0].mxu0
  %v173 = vadd.f32 %v54, %v172
  %174 = vmatprep.mubr.f32.mxu0 0.0
  %175 = vmatmul.mubr.f32.gmra.mrb[0].mxu0 %v78
  %v176 = vpop.f32.mrb[0].mxu0
  %v177 = vadd.f32 %v50, %v176
  %v178 = vpop.f32.mrb[0].mxu0
  %v179 = vadd.f32 %v54, %v178
  %180 = vmatprep.mubr.f32.mxu0 0.0
  %181 = vmatmul.mubr.f32.gmra.mrb[0].mxu0 %v81
  %v182 = vpop.f32.mrb[0].mxu0
  %v183 = vadd.f32 %v50, %v182
  %v184 = vpop.f32.mrb[0].mxu0
  %v185 = vadd.f32 %v54, %v184
  %186 = vmatprep.mubr.f32.mxu0 0.0
  %187 = vmatmul.mubr.f32.gmra.mrb[0].mxu0 %v84
  %v188 = vpop.f32.mrb[0].mxu0
  %v189 = vadd.f32 %v50, %v188
  %v190 = vpop.f32.mrb[0].mxu0
  %v191 = vadd.f32 %v54, %v190
  %192 = vmatprep.mubr.f32.mxu0 0.0
  %193 = vmatmul.mubr.f32.gmra.mrb[0].mxu0 %v87
  %v194 = vpop.f32.mrb[0].mxu0
  %v195 = vadd.f32 %v50, %v194
  %v196 = vpop.f32.mrb[0].mxu0
  %v197 = vadd.f32 %v54, %v196
  %198 = vmatprep.mubr.f32.mxu0 0.0
  %199 = vmatmul.mubr.f32.gmra.mrb[0].mxu0 %v90
  %v200 = vpop.f32.mrb[0].mxu0
  %v201 = vadd.f32 %v50, %v200
  %v202 = vpop.f32.mrb[0].mxu0
  %v203 = vadd.f32 %v54, %v202
  %204 = vdwg.mxu0
  %205 = vmatprep.subr.mxu0 %v40
  %206 = vmatpush1.msra.mxu0 %v39
  %207 = vmatprep.subr.mxu0 %v44
  %208 = vmatpush1.msra.mxu0 %v43
  %209 = vmatprep.subr.mxu0 0.0
  %210 = vmatpush1.msra.mxu0 0.0
  %211 = vmatprep.subr.mxu0 0.0
  %212 = vmatpush1.msra.mxu0 0.0
  %213 = vmatprep.subr.mxu0 0.0
  %214 = vmatpush1.msra.mxu0 0.0
  %215 = vmatprep.subr.mxu0 0.0
  %216 = vmatpush1.msra.mxu0 0.0
  %217 = vmatprep.subr.mxu0 0.0
  %218 = vmatpush1.msra.mxu0 0.0
  %219 = vmatprep.subr.mxu0 0.0
  %220 = vmatpush1.msra.mxu0 0.0
  %221 = vmatprep.subr.mxu0 0.0
  %222 = vmatpush1.msra.mxu0 0.0
  %223 = vmatprep.subr.mxu0 0.0
  %224 = vmatpush1.msra.mxu0 0.0
  %225 = vmatprep.subr.mxu0 0.0
  %226 = vmatpush1.msra.mxu0 0.0
  %227 = vmatprep.subr.mxu0 0.0
  %228 = vmatpush1.msra.mxu0 0.0
  %229 = vmatprep.subr.mxu0 0.0
  %230 = vmatpush1.msra.mxu0 0.0
  %231 = vmatprep.subr.mxu0 0.0
  %232 = vmatpush1.msra.mxu0 0.0
  %233 = vmatprep.subr.mxu0 0.0
  %234 = vmatpush1.msra.mxu0 0.0
  %235 = vmatprep.subr.mxu0 0.0
  %236 = vmatpush1.msra.mxu0 0.0
  %237 = vmatprep.subr.mxu0 0.0
  %238 = vmatpush1.msra.mxu0 0.0
  %239 = vmatprep.subr.mxu0 0.0
  %240 = vmatpush1.msra.mxu0 0.0
  %241 = vmatprep.subr.mxu0 0.0
  %242 = vmatpush1.msra.mxu0 0.0
  %243 = vmatprep.subr.mxu0 0.0
  %244 = vmatpush1.msra.mxu0 0.0
  %245 = vmatprep.subr.mxu0 0.0
  %246 = vmatpush1.msra.mxu0 0.0
  %247 = vmatprep.subr.mxu0 0.0
  %248 = vmatpush1.msra.mxu0 0.0
  %249 = vmatprep.subr.mxu0 0.0
  %250 = vmatpush1.msra.mxu0 0.0
  %251 = vmatprep.subr.mxu0 0.0
  %252 = vmatpush1.msra.mxu0 0.0
  %253 = vmatprep.subr.mxu0 0.0
  %254 = vmatpush1.msra.mxu0 0.0
  %255 = vmatprep.subr.mxu0 0.0
  %256 = vmatpush1.msra.mxu0 0.0
  %257 = vmatprep.subr.mxu0 0.0
  %258 = vmatpush1.msra.mxu0 0.0
  %259 = vmatprep.subr.mxu0 0.0
  %260 = vmatpush1.msra.mxu0 0.0
  %261 = vmatprep.subr.mxu0 0.0
  %262 = vmatpush1.msra.mxu0 0.0
  %263 = vmatprep.subr.mxu0 0.0
  %264 = vmatpush1.msra.mxu0 0.0
  %265 = vmatprep.subr.mxu0 0.0
  %266 = vmatpush1.msra.mxu0 0.0
  %267 = vmatprep.subr.mxu0 0.0
  %268 = vmatpush1.msra.mxu0 0.0
  %269 = vmatprep.mubr.f32.mxu0 0.0
  %270 = vmatmul.mubr.f32.gmra.mrb[0].mxu0 %v69
  %v271 = vpop.f32.mrb[0].mxu0
  %v272 = vadd.f32 %v58, %v271
  %v273 = vpop.f32.mrb[0].mxu0
  %v274 = vadd.f32 %v62, %v273
  %275 = vmatprep.mubr.f32.mxu0 0.0
  %276 = vmatmul.mubr.f32.gmra.mrb[0].mxu0 %v72
  %v277 = vpop.f32.mrb[0].mxu0
  %v278 = vadd.f32 %v58, %v277
  %v279 = vpop.f32.mrb[0].mxu0
  %v280 = vadd.f32 %v62, %v279
  %281 = vmatprep.mubr.f32.mxu0 0.0
  %282 = vmatmul.mubr.f32.gmra.mrb[0].mxu0 %v75
  %v283 = vpop.f32.mrb[0].mxu0
  %v284 = vadd.f32 %v58, %v283
  %v285 = vpop.f32.mrb[0].mxu0
  %v286 = vadd.f32 %v62, %v285
  %287 = vmatprep.mubr.f32.mxu0 0.0
  %288 = vmatmul.mubr.f32.gmra.mrb[0].mxu0 %v78
  %v289 = vpop.f32.mrb[0].mxu0
  %v290 = vadd.f32 %v58, %v289
  %v291 = vpop.f32.mrb[0].mxu0
  %v292 = vadd.f32 %v62, %v291
  %293 = vmatprep.mubr.f32.mxu0 0.0
  %294 = vmatmul.mubr.f32.gmra.mrb[0].mxu0 %v81
  %v295 = vpop.f32.mrb[0].mxu0
  %v296 = vadd.f32 %v58, %v295
  %v297 = vpop.f32.mrb[0].mxu0
  %v298 = vadd.f32 %v62, %v297
  %299 = vmatprep.mubr.f32.mxu0 0.0
  %300 = vmatmul.mubr.f32.gmra.mrb[0].mxu0 %v84
  %v301 = vpop.f32.mrb[0].mxu0
  %v302 = vadd.f32 %v58, %v301
  %v303 = vpop.f32.mrb[0].mxu0
  %v304 = vadd.f32 %v62, %v303
  %305 = vmatprep.mubr.f32.mxu0 0.0
  %306 = vmatmul.mubr.f32.gmra.mrb[0].mxu0 %v87
  %v307 = vpop.f32.mrb[0].mxu0
  %v308 = vadd.f32 %v58, %v307
  %v309 = vpop.f32.mrb[0].mxu0
  %v310 = vadd.f32 %v62, %v309
  %311 = vmatprep.mubr.f32.mxu0 0.0
  %312 = vmatmul.mubr.f32.gmra.mrb[0].mxu0 %v90
  %v313 = vpop.f32.mrb[0].mxu0
  %v314 = vadd.f32 %v58, %v313
  %v315 = vpop.f32.mrb[0].mxu0
  %v316 = vadd.f32 %v62, %v315
  %317 = vdwg.mxu0
  %v318 = vld [vmem:[%s2] sm:$0xff]
  %v319 = vld [vmem:[%s2 + $0x8] sm:$0xff]
  %v320 = vld [vmem:[%s2 + $0x10] sm:$0xff]
  %v321 = vld [vmem:[%s2 + $0x18] sm:$0xff]
  %v322 = vld [vmem:[%s2 + $0x20] sm:$0xff]
  %v323 = vld [vmem:[%s2 + $0x28] sm:$0xff]
  %v324 = vld [vmem:[%s2 + $0x30] sm:$0xff]
  %v325 = vld [vmem:[%s2 + $0x38] sm:$0xff]
  %v326 = vld [vmem:[%s2 + $0x40] sm:$0xff]
  %v327 = vld [vmem:[%s2 + $0x48] sm:$0xff]
  %v328 = vld [vmem:[%s2 + $0x50] sm:$0xff]
  %v329 = vld [vmem:[%s2 + $0x58] sm:$0xff]
  %v330 = vld [vmem:[%s2 + $0x60] sm:$0xff]
  %v331 = vld [vmem:[%s2 + $0x68] sm:$0xff]
  %v332 = vld [vmem:[%s2 + $0x70] sm:$0xff]
  %v333 = vld [vmem:[%s2 + $0x78] sm:$0xff]
  %v334 = vld [vmem:[%s2 + $0x80] sm:$0xff]
  %v335 = vld [vmem:[%s2 + $0x88] sm:$0xff]
  %v336 = vld [vmem:[%s2 + $0x90] sm:$0xff]
  %v337 = vld [vmem:[%s2 + $0x98] sm:$0xff]
  %v338 = vld [vmem:[%s2 + $0xa0] sm:$0xff]
  %v339 = vld [vmem:[%s2 + $0xa8] sm:$0xff]
  %v340 = vld [vmem:[%s2 + $0xb0] sm:$0xff]
  %v341 = vld [vmem:[%s2 + $0xb8] sm:$0xff]
  %v342 = vld [vmem:[%s2 + $0xc0] sm:$0xff]
  %v343 = vld [vmem:[%s2 + $0xc8] sm:$0xff]
  %v344 = vld [vmem:[%s2 + $0xd0] sm:$0xff]
  %v345 = vld [vmem:[%s2 + $0xd8] sm:$0xff]
  %v346 = vld [vmem:[%s2 + $0xe0] sm:$0xff]
  %v347 = vld [vmem:[%s2 + $0xe8] sm:$0xff]
  %v348 = vld [vmem:[%s2 + $0xf0] sm:$0xff]
  %v349 = vld [vmem:[%s2 + $0xf8] sm:$0xff]
  %v350 = vld [vmem:[%s2 + $0x100] sm:$0xff]
  %v351 = vld [vmem:[%s2 + $0x108] sm:$0xff]
  %v352 = vld [vmem:[%s2 + $0x110] sm:$0xff]
  %v353 = vld [vmem:[%s2 + $0x118] sm:$0xff]
  %v354 = vld [vmem:[%s2 + $0x120] sm:$0xff]
  %v355 = vld [vmem:[%s2 + $0x128] sm:$0xff]
  %v356 = vld [vmem:[%s2 + $0x130] sm:$0xff]
  %v357 = vld [vmem:[%s2 + $0x138] sm:$0xff]
  %v358 = vld [vmem:[%s2 + $0x140] sm:$0xff]
  %v359 = vld [vmem:[%s2 + $0x148] sm:$0xff]
  %v360 = vld [vmem:[%s2 + $0x150] sm:$0xff]
  %v361 = vld [vmem:[%s2 + $0x158] sm:$0xff]
  %v362 = vld [vmem:[%s2 + $0x160] sm:$0xff]
  %v363 = vld [vmem:[%s2 + $0x168] sm:$0xff]
  %v364 = vld [vmem:[%s2 + $0x170] sm:$0xff]
  %v365 = vld [vmem:[%s2 + $0x178] sm:$0xff]
  %v366 = vld [vmem:[%s2 + $0x180] sm:$0xff]
  %v367 = vld [vmem:[%s2 + $0x188] sm:$0xff]
  %v368 = vld [vmem:[%s2 + $0x190] sm:$0xff]
  %v369 = vld [vmem:[%s2 + $0x198] sm:$0xff]
  %v370 = vld [vmem:[%s2 + $0x1a0] sm:$0xff]
  %v371 = vld [vmem:[%s2 + $0x1a8] sm:$0xff]
  %v372 = vld [vmem:[%s2 + $0x1b0] sm:$0xff]
  %v373 = vld [vmem:[%s2 + $0x1b8] sm:$0xff]
  %v374 = vld [vmem:[%s2 + $0x1c0] sm:$0xff]
  %v375 = vld [vmem:[%s2 + $0x1c8] sm:$0xff]
  %v376 = vld [vmem:[%s2 + $0x1d0] sm:$0xff]
  %v377 = vld [vmem:[%s2 + $0x1d8] sm:$0xff]
  %v378 = vld [vmem:[%s2 + $0x1e0] sm:$0xff]
  %v379 = vld [vmem:[%s2 + $0x1e8] sm:$0xff]
  %v380 = vld [vmem:[%s2 + $0x1f0] sm:$0xff]
  %v381 = vld [vmem:[%s2 + $0x1f8] sm:$0xff]
  %v382 = vld [vmem:[#allocation2] sm:$0xff]
  %v383 = vld [vmem:[#allocation3] sm:$0xff]
  %384 = vmatprep.subr.mxu0 %v319
  %385 = vmatpush1.msra.mxu0 %v318
  %386 = vmatprep.subr.mxu0 %v323
  %387 = vmatpush1.msra.mxu0 %v322
  %388 = vmatprep.subr.mxu0 %v327
  %389 = vmatpush1.msra.mxu0 %v326
  %390 = vmatprep.subr.mxu0 %v331
  %391 = vmatpush1.msra.mxu0 %v330
  %392 = vmatprep.subr.mxu0 %v335
  %393 = vmatpush1.msra.mxu0 %v334
  %394 = vmatprep.subr.mxu0 %v339
  %395 = vmatpush1.msra.mxu0 %v338
  %396 = vmatprep.subr.mxu0 %v343
  %397 = vmatpush1.msra.mxu0 %v342
  %398 = vmatprep.subr.mxu0 %v347
  %399 = vmatpush1.msra.mxu0 %v346
  %400 = vmatprep.subr.mxu0 %v351
  %401 = vmatpush1.msra.mxu0 %v350
  %402 = vmatprep.subr.mxu0 %v355
  %403 = vmatpush1.msra.mxu0 %v354
  %404 = vmatprep.subr.mxu0 %v359
  %405 = vmatpush1.msra.mxu0 %v358
  %406 = vmatprep.subr.mxu0 %v363
  %407 = vmatpush1.msra.mxu0 %v362
  %408 = vmatprep.subr.mxu0 %v367
  %409 = vmatpush1.msra.mxu0 %v366
  %410 = vmatprep.subr.mxu0 %v371
  %411 = vmatpush1.msra.mxu0 %v370
  %412 = vmatprep.subr.mxu0 %v375
  %413 = vmatpush1.msra.mxu0 %v374
  %414 = vmatprep.subr.mxu0 %v379
  %415 = vmatpush1.msra.mxu0 %v378
  %416 = vmatprep.subr.mxu0 0.0
  %417 = vmatpush1.msra.mxu0 0.0
  %418 = vmatprep.subr.mxu0 0.0
  %419 = vmatpush1.msra.mxu0 0.0
  %420 = vmatprep.subr.mxu0 0.0
  %421 = vmatpush1.msra.mxu0 0.0
  %422 = vmatprep.subr.mxu0 0.0
  %423 = vmatpush1.msra.mxu0 0.0
  %424 = vmatprep.subr.mxu0 0.0
  %425 = vmatpush1.msra.mxu0 0.0
  %426 = vmatprep.subr.mxu0 0.0
  %427 = vmatpush1.msra.mxu0 0.0
  %428 = vmatprep.subr.mxu0 0.0
  %429 = vmatpush1.msra.mxu0 0.0
  %430 = vmatprep.subr.mxu0 0.0
  %431 = vmatpush1.msra.mxu0 0.0
  %432 = vmatprep.subr.mxu0 0.0
  %433 = vmatpush1.msra.mxu0 0.0
  %434 = vmatprep.subr.mxu0 0.0
  %435 = vmatpush1.msra.mxu0 0.0
  %436 = vmatprep.subr.mxu0 0.0
  %437 = vmatpush1.msra.mxu0 0.0
  %438 = vmatprep.subr.mxu0 0.0
  %439 = vmatpush1.msra.mxu0 0.0
  %440 = vmatprep.subr.mxu0 0.0
  %441 = vmatpush1.msra.mxu0 0.0
  %442 = vmatprep.subr.mxu0 0.0
  %443 = vmatpush1.msra.mxu0 0.0
  %444 = vmatprep.subr.mxu0 0.0
  %445 = vmatpush1.msra.mxu0 0.0
  %446 = vmatprep.subr.mxu0 0.0
  %447 = vmatpush1.msra.mxu0 0.0
  %448 = vmatprep.mubr.f32.mxu0 0.0
  %449 = vmatmul.mubr.f32.gmra.mrb[0].mxu0 %v382
  %v450 = vpop.f32.mrb[0].mxu0
  %v451 = vadd.f32 0.0, %v450
  %v452 = vpop.f32.mrb[0].mxu0
  %v453 = vadd.f32 0.0, %v452
  %454 = vdwg.mxu0
  %455 = vmatprep.subr.mxu0 %v321
  %456 = vmatpush1.msra.mxu0 %v320
  %457 = vmatprep.subr.mxu0 %v325
  %458 = vmatpush1.msra.mxu0 %v324
  %459 = vmatprep.subr.mxu0 %v329
  %460 = vmatpush1.msra.mxu0 %v328
  %461 = vmatprep.subr.mxu0 %v333
  %462 = vmatpush1.msra.mxu0 %v332
  %463 = vmatprep.subr.mxu0 %v337
  %464 = vmatpush1.msra.mxu0 %v336
  %465 = vmatprep.subr.mxu0 %v341
  %466 = vmatpush1.msra.mxu0 %v340
  %467 = vmatprep.subr.mxu0 %v345
  %468 = vmatpush1.msra.mxu0 %v344
  %469 = vmatprep.subr.mxu0 %v349
  %470 = vmatpush1.msra.mxu0 %v348
  %471 = vmatprep.subr.mxu0 %v353
  %472 = vmatpush1.msra.mxu0 %v352
  %473 = vmatprep.subr.mxu0 %v357
  %474 = vmatpush1.msra.mxu0 %v356
  %475 = vmatprep.subr.mxu0 %v361
  %476 = vmatpush1.msra.mxu0 %v360
  %477 = vmatprep.subr.mxu0 %v365
  %478 = vmatpush1.msra.mxu0 %v364
  %479 = vmatprep.subr.mxu0 %v369
  %480 = vmatpush1.msra.mxu0 %v368
  %481 = vmatprep.subr.mxu0 %v373
  %482 = vmatpush1.msra.mxu0 %v372
  %483 = vmatprep.subr.mxu0 %v377
  %484 = vmatpush1.msra.mxu0 %v376
  %485 = vmatprep.subr.mxu0 %v381
  %486 = vmatpush1.msra.mxu0 %v380
  %487 = vmatprep.subr.mxu0 0.0
  %488 = vmatpush1.msra.mxu0 0.0
  %489 = vmatprep.subr.mxu0 0.0
  %490 = vmatpush1.msra.mxu0 0.0
  %491 = vmatprep.subr.mxu0 0.0
  %492 = vmatpush1.msra.mxu0 0.0
  %493 = vmatprep.subr.mxu0 0.0
  %494 = vmatpush1.msra.mxu0 0.0
  %495 = vmatprep.subr.mxu0 0.0
  %496 = vmatpush1.msra.mxu0 0.0
  %497 = vmatprep.subr.mxu0 0.0
  %498 = vmatpush1.msra.mxu0 0.0
  %499 = vmatprep.subr.mxu0 0.0
  %500 = vmatpush1.msra.mxu0 0.0
  %501 = vmatprep.subr.mxu0 0.0
  %502 = vmatpush1.msra.mxu0 0.0
  %503 = vmatprep.subr.mxu0 0.0
  %504 = vmatpush1.msra.mxu0 0.0
  %505 = vmatprep.subr.mxu0 0.0
  %506 = vmatpush1.msra.mxu0 0.0
  %507 = vmatprep.subr.mxu0 0.0
  %508 = vmatpush1.msra.mxu0 0.0
  %509 = vmatprep.subr.mxu0 0.0
  %510 = vmatpush1.msra.mxu0 0.0
  %511 = vmatprep.subr.mxu0 0.0
  %512 = vmatpush1.msra.mxu0 0.0
  %513 = vmatprep.subr.mxu0 0.0
  %514 = vmatpush1.msra.mxu0 0.0
  %515 = vmatprep.subr.mxu0 0.0
  %516 = vmatpush1.msra.mxu0 0.0
  %517 = vmatprep.subr.mxu0 0.0
  %518 = vmatpush1.msra.mxu0 0.0
  %519 = vmatprep.mubr.f32.mxu0 0.0
  %520 = vmatmul.mubr.f32.gmra.mrb[0].mxu0 %v382
  %v521 = vpop.f32.mrb[0].mxu0
  %v522 = vadd.f32 0.0, %v521
  %v523 = vpop.f32.mrb[0].mxu0
  %v524 = vadd.f32 0.0, %v523
  %525 = vdwg.mxu0
  %v526 = vadd.f32 %v159, %v451
  %v527 = vadd.f32 %v161, %v453
  %v528 = vadd.f32 %v272, %v522
  %v529 = vadd.f32 %v274, %v524
  %v530 = vxor.u32 %v526, 2147483648
  %v531 = vmul.f32 %v530, 1.442695
  %v532 = vpow.pop %v531
  %v533 = vadd.f32 %v532, 1.0
  %v534 = vrcp.pop %v533
  %v535 = vmul.f32 1.0, %v534
  %v536 = vxor.u32 %v527, 2147483648
  %v537 = vmul.f32 %v536, 1.442695
  %v538 = vpow.pop %v537
  %v539 = vadd.f32 %v538, 1.0
  %v540 = vrcp.pop %v539
  %v541 = vmul.f32 1.0, %v540
  %v542 = vtanh.pop %v528
  %v543 = vxor.u32 %v529, 2147483648
  %v544 = vmul.f32 %v543, 1.442695
  %v545 = vpow.pop %v544
  %v546 = vadd.f32 %v545, 1.0
  %v547 = vrcp.pop %v546
  %v548 = vmul.f32 1.0, %v547
  %v549 = vmul.f32 %v541, %v383
  %v550 = vmul.f32 %v535, %v542
  %v551 = vadd.f32 %v549, %v550
  %v552 = vtanh.pop %v551
  %v553 = vmul.f32 %v548, %v552
  %554 = vst [vmem:[#allocation4] sm:$0xff] %v553
  %555 = vmatprep.subr.mxu0 %v319
  %556 = vmatpush1.msra.mxu0 %v318
  %557 = vmatprep.subr.mxu0 %v323
  %558 = vmatpush1.msra.mxu0 %v322
  %559 = vmatprep.subr.mxu0 %v327
  %560 = vmatpush1.msra.mxu0 %v326
  %561 = vmatprep.subr.mxu0 %v331
  %562 = vmatpush1.msra.mxu0 %v330
  %563 = vmatprep.subr.mxu0 %v335
  %564 = vmatpush1.msra.mxu0 %v334
  %565 = vmatprep.subr.mxu0 %v339
  %566 = vmatpush1.msra.mxu0 %v338
  %567 = vmatprep.subr.mxu0 %v343
  %568 = vmatpush1.msra.mxu0 %v342
  %569 = vmatprep.subr.mxu0 %v347
  %570 = vmatpush1.msra.mxu0 %v346
  %571 = vmatprep.subr.mxu0 %v351
  %572 = vmatpush1.msra.mxu0 %v350
  %573 = vmatprep.subr.mxu0 %v355
  %574 = vmatpush1.msra.mxu0 %v354
  %575 = vmatprep.subr.mxu0 %v359
  %576 = vmatpush1.msra.mxu0 %v358
  %577 = vmatprep.subr.mxu0 %v363
  %578 = vmatpush1.msra.mxu0 %v362
  %579 = vmatprep.subr.mxu0 %v367
  %580 = vmatpush1.msra.mxu0 %v366
  %581 = vmatprep.subr.mxu0 %v371
  %582 = vmatpush1.msra.mxu0 %v370
  %583 = vmatprep.subr.mxu0 %v375
  %584 = vmatpush1.msra.mxu0 %v374
  %585 = vmatprep.subr.mxu0 %v379
  %586 = vmatpush1.msra.mxu0 %v378
  %587 = vmatprep.subr.mxu0 0.0
  %588 = vmatpush1.msra.mxu0 0.0
  %589 = vmatprep.subr.mxu0 0.0
  %590 = vmatpush1.msra.mxu0 0.0
  %591 = vmatprep.subr.mxu0 0.0
  %592 = vmatpush1.msra.mxu0 0.0
  %593 = vmatprep.subr.mxu0 0.0
  %594 = vmatpush1.msra.mxu0 0.0
  %595 = vmatprep.subr.mxu0 0.0
  %596 = vmatpush1.msra.mxu0 0.0
  %597 = vmatprep.subr.mxu0 0.0
  %598 = vmatpush1.msra.mxu0 0.0
  %599 = vmatprep.subr.mxu0 0.0
  %600 = vmatpush1.msra.mxu0 0.0
  %601 = vmatprep.subr.mxu0 0.0
  %602 = vmatpush1.msra.mxu0 0.0
  %603 = vmatprep.subr.mxu0 0.0
  %604 = vmatpush1.msra.mxu0 0.0
  %605 = vmatprep.subr.mxu0 0.0
  %606 = vmatpush1.msra.mxu0 0.0
  %607 = vmatprep.subr.mxu0 0.0
  %608 = vmatpush1.msra.mxu0 0.0
  %609 = vmatprep.subr.mxu0 0.0
  %610 = vmatpush1.msra.mxu0 0.0
  %611 = vmatprep.subr.mxu0 0.0
  %612 = vmatpush1.msra.mxu0 0.0
  %613 = vmatprep.subr.mxu0 0.0
  %614 = vmatpush1.msra.mxu0 0.0
  %615 = vmatprep.subr.mxu0 0.0
  %616 = vmatpush1.msra.mxu0 0.0
  %617 = vmatprep.subr.mxu0 0.0
  %618 = vmatpush1.msra.mxu0 0.0
  %619 = vmatprep.mubr.f32.mxu0 0.0
  %620 = vmatmul.mubr.f32.gmra.mrb[0].mxu0 %v553
  %v621 = vpop.f32.mrb[0].mxu0
  %v622 = vadd.f32 0.0, %v621
  %v623 = vpop.f32.mrb[0].mxu0
  %v624 = vadd.f32 0.0, %v623
  %625 = vdwg.mxu0
  %626 = vmatprep.subr.mxu0 %v321
  %627 = vmatpush1.msra.mxu0 %v320
  %628 = vmatprep.subr.mxu0 %v325
  %629 = vmatpush1.msra.mxu0 %v324
  %630 = vmatprep.subr.mxu0 %v329
  %631 = vmatpush1.msra.mxu0 %v328
  %632 = vmatprep.subr.mxu0 %v333
  %633 = vmatpush1.msra.mxu0 %v332
  %634 = vmatprep.subr.mxu0 %v337
  %635 = vmatpush1.msra.mxu0 %v336
  %636 = vmatprep.subr.mxu0 %v341
  %637 = vmatpush1.msra.mxu0 %v340
  %638 = vmatprep.subr.mxu0 %v345
  %639 = vmatpush1.msra.mxu0 %v344
  %640 = vmatprep.subr.mxu0 %v349
  %641 = vmatpush1.msra.mxu0 %v348
  %642 = vmatprep.subr.mxu0 %v353
  %643 = vmatpush1.msra.mxu0 %v352
  %644 = vmatprep.subr.mxu0 %v357
  %645 = vmatpush1.msra.mxu0 %v356
  %646 = vmatprep.subr.mxu0 %v361
  %647 = vmatpush1.msra.mxu0 %v360
  %648 = vmatprep.subr.mxu0 %v365
  %649 = vmatpush1.msra.mxu0 %v364
  %650 = vmatprep.subr.mxu0 %v369
  %651 = vmatpush1.msra.mxu0 %v368
  %652 = vmatprep.subr.mxu0 %v373
  %653 = vmatpush1.msra.mxu0 %v372
  %654 = vmatprep.subr.mxu0 %v377
  %655 = vmatpush1.msra.mxu0 %v376
  %656 = vmatprep.subr.mxu0 %v381
  %657 = vmatpush1.msra.mxu0 %v380
  %658 = vmatprep.subr.mxu0 0.0
  %659 = vmatpush1.msra.mxu0 0.0
  %660 = vmatprep.subr.mxu0 0.0
  %661 = vmatpush1.msra.mxu0 0.0
  %662 = vmatprep.subr.mxu0 0.0
  %663 = vmatpush1.msra.mxu0 0.0
  %664 = vmatprep.subr.mxu0 0.0
  %665 = vmatpush1.msra.mxu0 0.0
  %666 = vmatprep.subr.mxu0 0.0
  %667 = vmatpush1.msra.mxu0 0.0
  %668 = vmatprep.subr.mxu0 0.0
  %669 = vmatpush1.msra.mxu0 0.0
  %670 = vmatprep.subr.mxu0 0.0
  %671 = vmatpush1.msra.mxu0 0.0
  %672 = vmatprep.subr.mxu0 0.0
  %673 = vmatpush1.msra.mxu0 0.0
  %674 = vmatprep.subr.mxu0 0.0
  %675 = vmatpush1.msra.mxu0 0.0
  %676 = vmatprep.subr.mxu0 0.0
  %677 = vmatpush1.msra.mxu0 0.0
  %678 = vmatprep.subr.mxu0 0.0
  %679 = vmatpush1.msra.mxu0 0.0
  %680 = vmatprep.subr.mxu0 0.0
  %681 = vmatpush1.msra.mxu0 0.0
  %682 = vmatprep.subr.mxu0 0.0
  %683 = vmatpush1.msra.mxu0 0.0
  %684 = vmatprep.subr.mxu0 0.0
  %685 = vmatpush1.msra.mxu0 0.0
  %686 = vmatprep.subr.mxu0 0.0
  %687 = vmatpush1.msra.mxu0 0.0
  %688 = vmatprep.subr.mxu0 0.0
  %689 = vmatpush1.msra.mxu0 0.0
  %690 = vmatprep.mubr.f32.mxu0 0.0
  %691 = vmatmul.mubr.f32.gmra.mrb[0].mxu0 %v553
  %v692 = vpop.f32.mrb[0].mxu0
  %v693 = vadd.f32 0.0, %v692
  %v694 = vpop.f32.mrb[0].mxu0
  %v695 = vadd.f32 0.0, %v694
  %696 = vdwg.mxu0
  %v697 = vadd.f32 %v165, %v622
  %v698 = vadd.f32 %v167, %v624
  %v699 = vadd.f32 %v278, %v693
  %v700 = vadd.f32 %v280, %v695
  %v701 = vxor.u32 %v697, 2147483648
  %v702 = vmul.f32 %v701, 1.442695
  %v703 = vpow.pop %v702
  %v704 = vadd.f32 %v703, 1.0
  %v705 = vrcp.pop %v704
  %v706 = vmul.f32 1.0, %v705
  %v707 = vxor.u32 %v698, 2147483648
  %v708 = vmul.f32 %v707, 1.442695
  %v709 = vpow.pop %v708
  %v710 = vadd.f32 %v709, 1.0
  %v711 = vrcp.pop %v710
  %v712 = vmul.f32 1.0, %v711
  %v713 = vtanh.pop %v699
  %v714 = vxor.u32 %v700, 2147483648
  %v715 = vmul.f32 %v714, 1.442695
  %v716 = vpow.pop %v715
  %v717 = vadd.f32 %v716, 1.0
  %v718 = vrcp.pop %v717
  %v719 = vmul.f32 1.0, %v718
  %v720 = vmul.f32 %v712, %v551
  %v721 = vmul.f32 %v706, %v713
  %v722 = vadd.f32 %v720, %v721
  %v723 = vtanh.pop %v722
  %v724 = vmul.f32 %v719, %v723
  %725 = vst [vmem:[#allocation4 + $0x8] sm:$0xff] %v724
  %726 = vmatprep.subr.mxu0 %v319
  %727 = vmatpush1.msra.mxu0 %v318
  %728 = vmatprep.subr.mxu0 %v323
  %729 = vmatpush1.msra.mxu0 %v322
  %730 = vmatprep.subr.mxu0 %v327
  %731 = vmatpush1.msra.mxu0 %v326
  %732 = vmatprep.subr.mxu0 %v331
  %733 = vmatpush1.msra.mxu0 %v330
  %734 = vmatprep.subr.mxu0 %v335
  %735 = vmatpush1.msra.mxu0 %v334
  %736 = vmatprep.subr.mxu0 %v339
  %737 = vmatpush1.msra.mxu0 %v338
  %738 = vmatprep.subr.mxu0 %v343
  %739 = vmatpush1.msra.mxu0 %v342
  %740 = vmatprep.subr.mxu0 %v347
  %741 = vmatpush1.msra.mxu0 %v346
  %742 = vmatprep.subr.mxu0 %v351
  %743 = vmatpush1.msra.mxu0 %v350
  %744 = vmatprep.subr.mxu0 %v355
  %745 = vmatpush1.msra.mxu0 %v354
  %746 = vmatprep.subr.mxu0 %v359
  %747 = vmatpush1.msra.mxu0 %v358
  %748 = vmatprep.subr.mxu0 %v363
  %749 = vmatpush1.msra.mxu0 %v362
  %750 = vmatprep.subr.mxu0 %v367
  %751 = vmatpush1.msra.mxu0 %v366
  %752 = vmatprep.subr.mxu0 %v371
  %753 = vmatpush1.msra.mxu0 %v370
  %754 = vmatprep.subr.mxu0 %v375
  %755 = vmatpush1.msra.mxu0 %v374
  %756 = vmatprep.subr.mxu0 %v379
  %757 = vmatpush1.msra.mxu0 %v378
  %758 = vmatprep.subr.mxu0 0.0
  %759 = vmatpush1.msra.mxu0 0.0
  %760 = vmatprep.subr.mxu0 0.0
  %761 = vmatpush1.msra.mxu0 0.0
  %762 = vmatprep.subr.mxu0 0.0
  %763 = vmatpush1.msra.mxu0 0.0
  %764 = vmatprep.subr.mxu0 0.0
  %765 = vmatpush1.msra.mxu0 0.0
  %766 = vmatprep.subr.mxu0 0.0
  %767 = vmatpush1.msra.mxu0 0.0
  %768 = vmatprep.subr.mxu0 0.0
  %769 = vmatpush1.msra.mxu0 0.0
  %770 = vmatprep.subr.mxu0 0.0
  %771 = vmatpush1.msra.mxu0 0.0
  %772 = vmatprep.subr.mxu0 0.0
  %773 = vmatpush1.msra.mxu0 0.0
  %774 = vmatprep.subr.mxu0 0.0
  %775 = vmatpush1.msra.mxu0 0.0
  %776 = vmatprep.subr.mxu0 0.0
  %777 = vmatpush1.msra.mxu0 0.0
  %778 = vmatprep.subr.mxu0 0.0
  %779 = vmatpush1.msra.mxu0 0.0
  %780 = vmatprep.subr.mxu0 0.0
  %781 = vmatpush1.msra.mxu0 0.0
  %782 = vmatprep.subr.mxu0 0.0
  %783 = vmatpush1.msra.mxu0 0.0
  %784 = vmatprep.subr.mxu0 0.0
  %785 = vmatpush1.msra.mxu0 0.0
  %786 = vmatprep.subr.mxu0 0.0
  %787 = vmatpush1.msra.mxu0 0.0
  %788 = vmatprep.subr.mxu0 0.0
  %789 = vmatpush1.msra.mxu0 0.0
  %790 = vmatprep.mubr.f32.mxu0 0.0
  %791 = vmatmul.mubr.f32.gmra.mrb[0].mxu0 %v724
  %v792 = vpop.f32.mrb[0].mxu0
  %v793 = vadd.f32 0.0, %v792
  %v794 = vpop.f32.mrb[0].mxu0
  %v795 = vadd.f32 0.0, %v794
  %796 = vdwg.mxu0
  %797 = vmatprep.subr.mxu0 %v321
  %798 = vmatpush1.msra.mxu0 %v320
  %799 = vmatprep.subr.mxu0 %v325
  %800 = vmatpush1.msra.mxu0 %v324
  %801 = vmatprep.subr.mxu0 %v329
  %802 = vmatpush1.msra.mxu0 %v328
  %803 = vmatprep.subr.mxu0 %v333
  %804 = vmatpush1.msra.mxu0 %v332
  %805 = vmatprep.subr.mxu0 %v337
  %806 = vmatpush1.msra.mxu0 %v336
  %807 = vmatprep.subr.mxu0 %v341
  %808 = vmatpush1.msra.mxu0 %v340
  %809 = vmatprep.subr.mxu0 %v345
  %810 = vmatpush1.msra.mxu0 %v344
  %811 = vmatprep.subr.mxu0 %v349
  %812 = vmatpush1.msra.mxu0 %v348
  %813 = vmatprep.subr.mxu0 %v353
  %814 = vmatpush1.msra.mxu0 %v352
  %815 = vmatprep.subr.mxu0 %v357
  %816 = vmatpush1.msra.mxu0 %v356
  %817 = vmatprep.subr.mxu0 %v361
  %818 = vmatpush1.msra.mxu0 %v360
  %819 = vmatprep.subr.mxu0 %v365
  %820 = vmatpush1.msra.mxu0 %v364
  %821 = vmatprep.subr.mxu0 %v369
  %822 = vmatpush1.msra.mxu0 %v368
  %823 = vmatprep.subr.mxu0 %v373
  %824 = vmatpush1.msra.mxu0 %v372
  %825 = vmatprep.subr.mxu0 %v377
  %826 = vmatpush1.msra.mxu0 %v376
  %827 = vmatprep.subr.mxu0 %v381
  %828 = vmatpush1.msra.mxu0 %v380
  %829 = vmatprep.subr.mxu0 0.0
  %830 = vmatpush1.msra.mxu0 0.0
  %831 = vmatprep.subr.mxu0 0.0
  %832 = vmatpush1.msra.mxu0 0.0
  %833 = vmatprep.subr.mxu0 0.0
  %834 = vmatpush1.msra.mxu0 0.0
  %835 = vmatprep.subr.mxu0 0.0
  %836 = vmatpush1.msra.mxu0 0.0
  %837 = vmatprep.subr.mxu0 0.0
  %838 = vmatpush1.msra.mxu0 0.0
  %839 = vmatprep.subr.mxu0 0.0
  %840 = vmatpush1.msra.mxu0 0.0
  %841 = vmatprep.subr.mxu0 0.0
  %842 = vmatpush1.msra.mxu0 0.0
  %843 = vmatprep.subr.mxu0 0.0
  %844 = vmatpush1.msra.mxu0 0.0
  %845 = vmatprep.subr.mxu0 0.0
  %846 = vmatpush1.msra.mxu0 0.0
  %847 = vmatprep.subr.mxu0 0.0
  %848 = vmatpush1.msra.mxu0 0.0
  %849 = vmatprep.subr.mxu0 0.0
  %850 = vmatpush1.msra.mxu0 0.0
  %851 = vmatprep.subr.mxu0 0.0
  %852 = vmatpush1.msra.mxu0 0.0
  %853 = vmatprep.subr.mxu0 0.0
  %854 = vmatpush1.msra.mxu0 0.0
  %855 = vmatprep.subr.mxu0 0.0
  %856 = vmatpush1.msra.mxu0 0.0
  %857 = vmatprep.subr.mxu0 0.0
  %858 = vmatpush1.msra.mxu0 0.0
  %859 = vmatprep.subr.mxu0 0.0
  %860 = vmatpush1.msra.mxu0 0.0
  %861 = vmatprep.mubr.f32.mxu0 0.0
  %862 = vmatmul.mubr.f32.gmra.mrb[0].mxu0 %v724
  %v863 = vpop.f32.mrb[0].mxu0
  %v864 = vadd.f32 0.0, %v863
  %v865 = vpop.f32.mrb[0].mxu0
  %v866 = vadd.f32 0.0, %v865
  %867 = vdwg.mxu0
  %v868 = vadd.f32 %v171, %v793
  %v869 = vadd.f32 %v173, %v795
  %v870 = vadd.f32 %v284, %v864
  %v871 = vadd.f32 %v286, %v866
  %v872 = vxor.u32 %v868, 2147483648
  %v873 = vmul.f32 %v872, 1.442695
  %v874 = vpow.pop %v873
  %v875 = vadd.f32 %v874, 1.0
  %v876 = vrcp.pop %v875
  %v877 = vmul.f32 1.0, %v876
  %v878 = vxor.u32 %v869, 2147483648
  %v879 = vmul.f32 %v878, 1.442695
  %v880 = vpow.pop %v879
  %v881 = vadd.f32 %v880, 1.0
  %v882 = vrcp.pop %v881
  %v883 = vmul.f32 1.0, %v882
  %v884 = vtanh.pop %v870
  %v885 = vxor.u32 %v871, 2147483648
  %v886 = vmul.f32 %v885, 1.442695
  %v887 = vpow.pop %v886
  %v888 = vadd.f32 %v887, 1.0
  %v889 = vrcp.pop %v888
  %v890 = vmul.f32 1.0, %v889
  %v891 = vmul.f32 %v883, %v722
  %v892 = vmul.f32 %v877, %v884
  %v893 = vadd.f32 %v891, %v892
  %v894 = vtanh.pop %v893
  %v895 = vmul.f32 %v890, %v894
  %896 = vst [vmem:[#allocation4 + $0x10] sm:$0xff] %v895
  %897 = vmatprep.subr.mxu0 %v319
  %898 = vmatpush1.msra.mxu0 %v318
  %899 = vmatprep.subr.mxu0 %v323
  %900 = vmatpush1.msra.mxu0 %v322
  %901 = vmatprep.subr.mxu0 %v327
  %902 = vmatpush1.msra.mxu0 %v326
  %903 = vmatprep.subr.mxu0 %v331
  %904 = vmatpush1.msra.mxu0 %v330
  %905 = vmatprep.subr.mxu0 %v335
  %906 = vmatpush1.msra.mxu0 %v334
  %907 = vmatprep.subr.mxu0 %v339
  %908 = vmatpush1.msra.mxu0 %v338
  %909 = vmatprep.subr.mxu0 %v343
  %910 = vmatpush1.msra.mxu0 %v342
  %911 = vmatprep.subr.mxu0 %v347
  %912 = vmatpush1.msra.mxu0 %v346
  %913 = vmatprep.subr.mxu0 %v351
  %914 = vmatpush1.msra.mxu0 %v350
  %915 = vmatprep.subr.mxu0 %v355
  %916 = vmatpush1.msra.mxu0 %v354
  %917 = vmatprep.subr.mxu0 %v359
  %918 = vmatpush1.msra.mxu0 %v358
  %919 = vmatprep.subr.mxu0 %v363
  %920 = vmatpush1.msra.mxu0 %v362
  %921 = vmatprep.subr.mxu0 %v367
  %922 = vmatpush1.msra.mxu0 %v366
  %923 = vmatprep.subr.mxu0 %v371
  %924 = vmatpush1.msra.mxu0 %v370
  %925 = vmatprep.subr.mxu0 %v375
  %926 = vmatpush1.msra.mxu0 %v374
  %927 = vmatprep.subr.mxu0 %v379
  %928 = vmatpush1.msra.mxu0 %v378
  %929 = vmatprep.subr.mxu0 0.0
  %930 = vmatpush1.msra.mxu0 0.0
  %931 = vmatprep.subr.mxu0 0.0
  %932 = vmatpush1.msra.mxu0 0.0
  %933 = vmatprep.subr.mxu0 0.0
  %934 = vmatpush1.msra.mxu0 0.0
  %935 = vmatprep.subr.mxu0 0.0
  %936 = vmatpush1.msra.mxu0 0.0
  %937 = vmatprep.subr.mxu0 0.0
  %938 = vmatpush1.msra.mxu0 0.0
  %939 = vmatprep.subr.mxu0 0.0
  %940 = vmatpush1.msra.mxu0 0.0
  %941 = vmatprep.subr.mxu0 0.0
  %942 = vmatpush1.msra.mxu0 0.0
  %943 = vmatprep.subr.mxu0 0.0
  %944 = vmatpush1.msra.mxu0 0.0
  %945 = vmatprep.subr.mxu0 0.0
  %946 = vmatpush1.msra.mxu0 0.0
  %947 = vmatprep.subr.mxu0 0.0
  %948 = vmatpush1.msra.mxu0 0.0
  %949 = vmatprep.subr.mxu0 0.0
  %950 = vmatpush1.msra.mxu0 0.0
  %951 = vmatprep.subr.mxu0 0.0
  %952 = vmatpush1.msra.mxu0 0.0
  %953 = vmatprep.subr.mxu0 0.0
  %954 = vmatpush1.msra.mxu0 0.0
  %955 = vmatprep.subr.mxu0 0.0
  %956 = vmatpush1.msra.mxu0 0.0
  %957 = vmatprep.subr.mxu0 0.0
  %958 = vmatpush1.msra.mxu0 0.0
  %959 = vmatprep.subr.mxu0 0.0
  %960 = vmatpush1.msra.mxu0 0.0
  %961 = vmatprep.mubr.f32.mxu0 0.0
  %962 = vmatmul.mubr.f32.gmra.mrb[0].mxu0 %v895
  %v963 = vpop.f32.mrb[0].mxu0
  %v964 = vadd.f32 0.0, %v963
  %v965 = vpop.f32.mrb[0].mxu0
  %v966 = vadd.f32 0.0, %v965
  %967 = vdwg.mxu0
  %968 = vmatprep.subr.mxu0 %v321
  %969 = vmatpush1.msra.mxu0 %v320
  %970 = vmatprep.subr.mxu0 %v325
  %971 = vmatpush1.msra.mxu0 %v324
  %972 = vmatprep.subr.mxu0 %v329
  %973 = vmatpush1.msra.mxu0 %v328
  %974 = vmatprep.subr.mxu0 %v333
  %975 = vmatpush1.msra.mxu0 %v332
  %976 = vmatprep.subr.mxu0 %v337
  %977 = vmatpush1.msra.mxu0 %v336
  %978 = vmatprep.subr.mxu0 %v341
  %979 = vmatpush1.msra.mxu0 %v340
  %980 = vmatprep.subr.mxu0 %v345
  %981 = vmatpush1.msra.mxu0 %v344
  %982 = vmatprep.subr.mxu0 %v349
  %983 = vmatpush1.msra.mxu0 %v348
  %984 = vmatprep.subr.mxu0 %v353
  %985 = vmatpush1.msra.mxu0 %v352
  %986 = vmatprep.subr.mxu0 %v357
  %987 = vmatpush1.msra.mxu0 %v356
  %988 = vmatprep.subr.mxu0 %v361
  %989 = vmatpush1.msra.mxu0 %v360
  %990 = vmatprep.subr.mxu0 %v365
  %991 = vmatpush1.msra.mxu0 %v364
  %992 = vmatprep.subr.mxu0 %v369
  %993 = vmatpush1.msra.mxu0 %v368
  %994 = vmatprep.subr.mxu0 %v373
  %995 = vmatpush1.msra.mxu0 %v372
  %996 = vmatprep.subr.mxu0 %v377
  %997 = vmatpush1.msra.mxu0 %v376
  %998 = vmatprep.subr.mxu0 %v381
  %999 = vmatpush1.msra.mxu0 %v380
  %1000 = vmatprep.subr.mxu0 0.0
  %1001 = vmatpush1.msra.mxu0 0.0
  %1002 = vmatprep.subr.mxu0 0.0
  %1003 = vmatpush1.msra.mxu0 0.0
  %1004 = vmatprep.subr.mxu0 0.0
  %1005 = vmatpush1.msra.mxu0 0.0
  %1006 = vmatprep.subr.mxu0 0.0
  %1007 = vmatpush1.msra.mxu0 0.0
  %1008 = vmatprep.subr.mxu0 0.0
  %1009 = vmatpush1.msra.mxu0 0.0
  %1010 = vmatprep.subr.mxu0 0.0
  %1011 = vmatpush1.msra.mxu0 0.0
  %1012 = vmatprep.subr.mxu0 0.0
  %1013 = vmatpush1.msra.mxu0 0.0
  %1014 = vmatprep.subr.mxu0 0.0
  %1015 = vmatpush1.msra.mxu0 0.0
  %1016 = vmatprep.subr.mxu0 0.0
  %1017 = vmatpush1.msra.mxu0 0.0
  %1018 = vmatprep.subr.mxu0 0.0
  %1019 = vmatpush1.msra.mxu0 0.0
  %1020 = vmatprep.subr.mxu0 0.0
  %1021 = vmatpush1.msra.mxu0 0.0
  %1022 = vmatprep.subr.mxu0 0.0
  %1023 = vmatpush1.msra.mxu0 0.0
  %1024 = vmatprep.subr.mxu0 0.0
  %1025 = vmatpush1.msra.mxu0 0.0
  %1026 = vmatprep.subr.mxu0 0.0
  %1027 = vmatpush1.msra.mxu0 0.0
  %1028 = vmatprep.subr.mxu0 0.0
  %1029 = vmatpush1.msra.mxu0 0.0
  %1030 = vmatprep.subr.mxu0 0.0
  %1031 = vmatpush1.msra.mxu0 0.0
  %1032 = vmatprep.mubr.f32.mxu0 0.0
  %1033 = vmatmul.mubr.f32.gmra.mrb[0].mxu0 %v895
  %v1034 = vpop.f32.mrb[0].mxu0
  %v1035 = vadd.f32 0.0, %v1034
  %v1036 = vpop.f32.mrb[0].mxu0
  %v1037 = vadd.f32 0.0, %v1036
  %1038 = vdwg.mxu0
  %v1039 = vadd.f32 %v177, %v964
  %v1040 = vadd.f32 %v179, %v966
  %v1041 = vadd.f32 %v290, %v1035
  %v1042 = vadd.f32 %v292, %v1037
  %v1043 = vxor.u32 %v1039, 2147483648
  %v1044 = vmul.f32 %v1043, 1.442695
  %v1045 = vpow.pop %v1044
  %v1046 = vadd.f32 %v1045, 1.0
  %v1047 = vrcp.pop %v1046
  %v1048 = vmul.f32 1.0, %v1047
  %v1049 = vxor.u32 %v1040, 2147483648
  %v1050 = vmul.f32 %v1049, 1.442695
  %v1051 = vpow.pop %v1050
  %v1052 = vadd.f32 %v1051, 1.0
  %v1053 = vrcp.pop %v1052
  %v1054 = vmul.f32 1.0, %v1053
  %v1055 = vtanh.pop %v1041
  %v1056 = vxor.u32 %v1042, 2147483648
  %v1057 = vmul.f32 %v1056, 1.442695
  %v1058 = vpow.pop %v1057
  %v1059 = vadd.f32 %v1058, 1.0
  %v1060 = vrcp.pop %v1059
  %v1061 = vmul.f32 1.0, %v1060
  %v1062 = vmul.f32 %v1054, %v893
  %v1063 = vmul.f32 %v1048, %v1055
  %v1064 = vadd.f32 %v1062, %v1063
  %v1065 = vtanh.pop %v1064
  %v1066 = vmul.f32 %v1061, %v1065
  %1067 = vst [vmem:[#allocation4 + $0x18] sm:$0xff] %v1066
  %1068 = vmatprep.subr.mxu0 %v319
  %1069 = vmatpush1.msra.mxu0 %v318
  %1070 = vmatprep.subr.mxu0 %v323
  %1071 = vmatpush1.msra.mxu0 %v322
  %1072 = vmatprep.subr.mxu0 %v327
  %1073 = vmatpush1.msra.mxu0 %v326
  %1074 = vmatprep.subr.mxu0 %v331
  %1075 = vmatpush1.msra.mxu0 %v330
  %1076 = vmatprep.subr.mxu0 %v335
  %1077 = vmatpush1.msra.mxu0 %v334
  %1078 = vmatprep.subr.mxu0 %v339
  %1079 = vmatpush1.msra.mxu0 %v338
  %1080 = vmatprep.subr.mxu0 %v343
  %1081 = vmatpush1.msra.mxu0 %v342
  %1082 = vmatprep.subr.mxu0 %v347
  %1083 = vmatpush1.msra.mxu0 %v346
  %1084 = vmatprep.subr.mxu0 %v351
  %1085 = vmatpush1.msra.mxu0 %v350
  %1086 = vmatprep.subr.mxu0 %v355
  %1087 = vmatpush1.msra.mxu0 %v354
  %1088 = vmatprep.subr.mxu0 %v359
  %1089 = vmatpush1.msra.mxu0 %v358
  %1090 = vmatprep.subr.mxu0 %v363
  %1091 = vmatpush1.msra.mxu0 %v362
  %1092 = vmatprep.subr.mxu0 %v367
  %1093 = vmatpush1.msra.mxu0 %v366
  %1094 = vmatprep.subr.mxu0 %v371
  %1095 = vmatpush1.msra.mxu0 %v370
  %1096 = vmatprep.subr.mxu0 %v375
  %1097 = vmatpush1.msra.mxu0 %v374
  %1098 = vmatprep.subr.mxu0 %v379
  %1099 = vmatpush1.msra.mxu0 %v378
  %1100 = vmatprep.subr.mxu0 0.0
  %1101 = vmatpush1.msra.mxu0 0.0
  %1102 = vmatprep.subr.mxu0 0.0
  %1103 = vmatpush1.msra.mxu0 0.0
  %1104 = vmatprep.subr.mxu0 0.0
  %1105 = vmatpush1.msra.mxu0 0.0
  %1106 = vmatprep.subr.mxu0 0.0
  %1107 = vmatpush1.msra.mxu0 0.0
  %1108 = vmatprep.subr.mxu0 0.0
  %1109 = vmatpush1.msra.mxu0 0.0
  %1110 = vmatprep.subr.mxu0 0.0
  %1111 = vmatpush1.msra.mxu0 0.0
  %1112 = vmatprep.subr.mxu0 0.0
  %1113 = vmatpush1.msra.mxu0 0.0
  %1114 = vmatprep.subr.mxu0 0.0
  %1115 = vmatpush1.msra.mxu0 0.0
  %1116 = vmatprep.subr.mxu0 0.0
  %1117 = vmatpush1.msra.mxu0 0.0
  %1118 = vmatprep.subr.mxu0 0.0
  %1119 = vmatpush1.msra.mxu0 0.0
  %1120 = vmatprep.subr.mxu0 0.0
  %1121 = vmatpush1.msra.mxu0 0.0
  %1122 = vmatprep.subr.mxu0 0.0
  %1123 = vmatpush1.msra.mxu0 0.0
  %1124 = vmatprep.subr.mxu0 0.0
  %1125 = vmatpush1.msra.mxu0 0.0
  %1126 = vmatprep.subr.mxu0 0.0
  %1127 = vmatpush1.msra.mxu0 0.0
  %1128 = vmatprep.subr.mxu0 0.0
  %1129 = vmatpush1.msra.mxu0 0.0
  %1130 = vmatprep.subr.mxu0 0.0
  %1131 = vmatpush1.msra.mxu0 0.0
  %1132 = vmatprep.mubr.f32.mxu0 0.0
  %1133 = vmatmul.mubr.f32.gmra.mrb[0].mxu0 %v1066
  %v1134 = vpop.f32.mrb[0].mxu0
  %v1135 = vadd.f32 0.0, %v1134
  %v1136 = vpop.f32.mrb[0].mxu0
  %v1137 = vadd.f32 0.0, %v1136
  %1138 = vdwg.mxu0
  %1139 = vmatprep.subr.mxu0 %v321
  %1140 = vmatpush1.msra.mxu0 %v320
  %1141 = vmatprep.subr.mxu0 %v325
  %1142 = vmatpush1.msra.mxu0 %v324
  %1143 = vmatprep.subr.mxu0 %v329
  %1144 = vmatpush1.msra.mxu0 %v328
  %1145 = vmatprep.subr.mxu0 %v333
  %1146 = vmatpush1.msra.mxu0 %v332
  %1147 = vmatprep.subr.mxu0 %v337
  %1148 = vmatpush1.msra.mxu0 %v336
  %1149 = vmatprep.subr.mxu0 %v341
  %1150 = vmatpush1.msra.mxu0 %v340
  %1151 = vmatprep.subr.mxu0 %v345
  %1152 = vmatpush1.msra.mxu0 %v344
  %1153 = vmatprep.subr.mxu0 %v349
  %1154 = vmatpush1.msra.mxu0 %v348
  %1155 = vmatprep.subr.mxu0 %v353
  %1156 = vmatpush1.msra.mxu0 %v352
  %1157 = vmatprep.subr.mxu0 %v357
  %1158 = vmatpush1.msra.mxu0 %v356
  %1159 = vmatprep.subr.mxu0 %v361
  %1160 = vmatpush1.msra.mxu0 %v360
  %1161 = vmatprep.subr.mxu0 %v365
  %1162 = vmatpush1.msra.mxu0 %v364
  %1163 = vmatprep.subr.mxu0 %v369
  %1164 = vmatpush1.msra.mxu0 %v368
  %1165 = vmatprep.subr.mxu0 %v373
  %1166 = vmatpush1.msra.mxu0 %v372
  %1167 = vmatprep.subr.mxu0 %v377
  %1168 = vmatpush1.msra.mxu0 %v376
  %1169 = vmatprep.subr.mxu0 %v381
  %1170 = vmatpush1.msra.mxu0 %v380
  %1171 = vmatprep.subr.mxu0 0.0
  %1172 = vmatpush1.msra.mxu0 0.0
  %1173 = vmatprep.subr.mxu0 0.0
  %1174 = vmatpush1.msra.mxu0 0.0
  %1175 = vmatprep.subr.mxu0 0.0
  %1176 = vmatpush1.msra.mxu0 0.0
  %1177 = vmatprep.subr.mxu0 0.0
  %1178 = vmatpush1.msra.mxu0 0.0
  %1179 = vmatprep.subr.mxu0 0.0
  %1180 = vmatpush1.msra.mxu0 0.0
  %1181 = vmatprep.subr.mxu0 0.0
  %1182 = vmatpush1.msra.mxu0 0.0
  %1183 = vmatprep.subr.mxu0 0.0
  %1184 = vmatpush1.msra.mxu0 0.0
  %1185 = vmatprep.subr.mxu0 0.0
  %1186 = vmatpush1.msra.mxu0 0.0
  %1187 = vmatprep.subr.mxu0 0.0
  %1188 = vmatpush1.msra.mxu0 0.0
  %1189 = vmatprep.subr.mxu0 0.0
  %1190 = vmatpush1.msra.mxu0 0.0
  %1191 = vmatprep.subr.mxu0 0.0
  %1192 = vmatpush1.msra.mxu0 0.0
  %1193 = vmatprep.subr.mxu0 0.0
  %1194 = vmatpush1.msra.mxu0 0.0
  %1195 = vmatprep.subr.mxu0 0.0
  %1196 = vmatpush1.msra.mxu0 0.0
  %1197 = vmatprep.subr.mxu0 0.0
  %1198 = vmatpush1.msra.mxu0 0.0
  %1199 = vmatprep.subr.mxu0 0.0
  %1200 = vmatpush1.msra.mxu0 0.0
  %1201 = vmatprep.subr.mxu0 0.0
  %1202 = vmatpush1.msra.mxu0 0.0
  %1203 = vmatprep.mubr.f32.mxu0 0.0
  %1204 = vmatmul.mubr.f32.gmra.mrb[0].mxu0 %v1066
  %v1205 = vpop.f32.mrb[0].mxu0
  %v1206 = vadd.f32 0.0, %v1205
  %v1207 = vpop.f32.mrb[0].mxu0
  %v1208 = vadd.f32 0.0, %v1207
  %1209 = vdwg.mxu0
  %v1210 = vadd.f32 %v183, %v1135
  %v1211 = vadd.f32 %v185, %v1137
  %v1212 = vadd.f32 %v296, %v1206
  %v1213 = vadd.f32 %v298, %v1208
  %v1214 = vxor.u32 %v1210, 2147483648
  %v1215 = vmul.f32 %v1214, 1.442695
  %v1216 = vpow.pop %v1215
  %v1217 = vadd.f32 %v1216, 1.0
  %v1218 = vrcp.pop %v1217
  %v1219 = vmul.f32 1.0, %v1218
  %v1220 = vxor.u32 %v1211, 2147483648
  %v1221 = vmul.f32 %v1220, 1.442695
  %v1222 = vpow.pop %v1221
  %v1223 = vadd.f32 %v1222, 1.0
  %v1224 = vrcp.pop %v1223
  %v1225 = vmul.f32 1.0, %v1224
  %v1226 = vtanh.pop %v1212
  %v1227 = vxor.u32 %v1213, 2147483648
  %v1228 = vmul.f32 %v1227, 1.442695
  %v1229 = vpow.pop %v1228
  %v1230 = vadd.f32 %v1229, 1.0
  %v1231 = vrcp.pop %v1230
  %v1232 = vmul.f32 1.0, %v1231
  %v1233 = vmul.f32 %v1225, %v1064
  %v1234 = vmul.f32 %v1219, %v1226
  %v1235 = vadd.f32 %v1233, %v1234
  %v1236 = vtanh.pop %v1235
  %v1237 = vmul.f32 %v1232, %v1236
  %1238 = vst [vmem:[#allocation4 + $0x20] sm:$0xff] %v1237
  %1239 = vmatprep.subr.mxu0 %v319
  %1240 = vmatpush1.msra.mxu0 %v318
  %1241 = vmatprep.subr.mxu0 %v323
  %1242 = vmatpush1.msra.mxu0 %v322
  %1243 = vmatprep.subr.mxu0 %v327
  %1244 = vmatpush1.msra.mxu0 %v326
  %1245 = vmatprep.subr.mxu0 %v331
  %1246 = vmatpush1.msra.mxu0 %v330
  %1247 = vmatprep.subr.mxu0 %v335
  %1248 = vmatpush1.msra.mxu0 %v334
  %1249 = vmatprep.subr.mxu0 %v339
  %1250 = vmatpush1.msra.mxu0 %v338
  %1251 = vmatprep.subr.mxu0 %v343
  %1252 = vmatpush1.msra.mxu0 %v342
  %1253 = vmatprep.subr.mxu0 %v347
  %1254 = vmatpush1.msra.mxu0 %v346
  %1255 = vmatprep.subr.mxu0 %v351
  %1256 = vmatpush1.msra.mxu0 %v350
  %1257 = vmatprep.subr.mxu0 %v355
  %1258 = vmatpush1.msra.mxu0 %v354
  %1259 = vmatprep.subr.mxu0 %v359
  %1260 = vmatpush1.msra.mxu0 %v358
  %1261 = vmatprep.subr.mxu0 %v363
  %1262 = vmatpush1.msra.mxu0 %v362
  %1263 = vmatprep.subr.mxu0 %v367
  %1264 = vmatpush1.msra.mxu0 %v366
  %1265 = vmatprep.subr.mxu0 %v371
  %1266 = vmatpush1.msra.mxu0 %v370
  %1267 = vmatprep.subr.mxu0 %v375
  %1268 = vmatpush1.msra.mxu0 %v374
  %1269 = vmatprep.subr.mxu0 %v379
  %1270 = vmatpush1.msra.mxu0 %v378
  %1271 = vmatprep.subr.mxu0 0.0
  %1272 = vmatpush1.msra.mxu0 0.0
  %1273 = vmatprep.subr.mxu0 0.0
  %1274 = vmatpush1.msra.mxu0 0.0
  %1275 = vmatprep.subr.mxu0 0.0
  %1276 = vmatpush1.msra.mxu0 0.0
  %1277 = vmatprep.subr.mxu0 0.0
  %1278 = vmatpush1.msra.mxu0 0.0
  %1279 = vmatprep.subr.mxu0 0.0
  %1280 = vmatpush1.msra.mxu0 0.0
  %1281 = vmatprep.subr.mxu0 0.0
  %1282 = vmatpush1.msra.mxu0 0.0
  %1283 = vmatprep.subr.mxu0 0.0
  %1284 = vmatpush1.msra.mxu0 0.0
  %1285 = vmatprep.subr.mxu0 0.0
  %1286 = vmatpush1.msra.mxu0 0.0
  %1287 = vmatprep.subr.mxu0 0.0
  %1288 = vmatpush1.msra.mxu0 0.0
  %1289 = vmatprep.subr.mxu0 0.0
  %1290 = vmatpush1.msra.mxu0 0.0
  %1291 = vmatprep.subr.mxu0 0.0
  %1292 = vmatpush1.msra.mxu0 0.0
  %1293 = vmatprep.subr.mxu0 0.0
  %1294 = vmatpush1.msra.mxu0 0.0
  %1295 = vmatprep.subr.mxu0 0.0
  %1296 = vmatpush1.msra.mxu0 0.0
  %1297 = vmatprep.subr.mxu0 0.0
  %1298 = vmatpush1.msra.mxu0 0.0
  %1299 = vmatprep.subr.mxu0 0.0
  %1300 = vmatpush1.msra.mxu0 0.0
  %1301 = vmatprep.subr.mxu0 0.0
  %1302 = vmatpush1.msra.mxu0 0.0
  %1303 = vmatprep.mubr.f32.mxu0 0.0
  %1304 = vmatmul.mubr.f32.gmra.mrb[0].mxu0 %v1237
  %v1305 = vpop.f32.mrb[0].mxu0
  %v1306 = vadd.f32 0.0, %v1305
  %v1307 = vpop.f32.mrb[0].mxu0
  %v1308 = vadd.f32 0.0, %v1307
  %1309 = vdwg.mxu0
  %1310 = vmatprep.subr.mxu0 %v321
  %1311 = vmatpush1.msra.mxu0 %v320
  %1312 = vmatprep.subr.mxu0 %v325
  %1313 = vmatpush1.msra.mxu0 %v324
  %1314 = vmatprep.subr.mxu0 %v329
  %1315 = vmatpush1.msra.mxu0 %v328
  %1316 = vmatprep.subr.mxu0 %v333
  %1317 = vmatpush1.msra.mxu0 %v332
  %1318 = vmatprep.subr.mxu0 %v337
  %1319 = vmatpush1.msra.mxu0 %v336
  %1320 = vmatprep.subr.mxu0 %v341
  %1321 = vmatpush1.msra.mxu0 %v340
  %1322 = vmatprep.subr.mxu0 %v345
  %1323 = vmatpush1.msra.mxu0 %v344
  %1324 = vmatprep.subr.mxu0 %v349
  %1325 = vmatpush1.msra.mxu0 %v348
  %1326 = vmatprep.subr.mxu0 %v353
  %1327 = vmatpush1.msra.mxu0 %v352
  %1328 = vmatprep.subr.mxu0 %v357
  %1329 = vmatpush1.msra.mxu0 %v356
  %1330 = vmatprep.subr.mxu0 %v361
  %1331 = vmatpush1.msra.mxu0 %v360
  %1332 = vmatprep.subr.mxu0 %v365
  %1333 = vmatpush1.msra.mxu0 %v364
  %1334 = vmatprep.subr.mxu0 %v369
  %1335 = vmatpush1.msra.mxu0 %v368
  %1336 = vmatprep.subr.mxu0 %v373
  %1337 = vmatpush1.msra.mxu0 %v372
  %1338 = vmatprep.subr.mxu0 %v377
  %1339 = vmatpush1.msra.mxu0 %v376
  %1340 = vmatprep.subr.mxu0 %v381
  %1341 = vmatpush1.msra.mxu0 %v380
  %1342 = vmatprep.subr.mxu0 0.0
  %1343 = vmatpush1.msra.mxu0 0.0
  %1344 = vmatprep.subr.mxu0 0.0
  %1345 = vmatpush1.msra.mxu0 0.0
  %1346 = vmatprep.subr.mxu0 0.0
  %1347 = vmatpush1.msra.mxu0 0.0
  %1348 = vmatprep.subr.mxu0 0.0
  %1349 = vmatpush1.msra.mxu0 0.0
  %1350 = vmatprep.subr.mxu0 0.0
  %1351 = vmatpush1.msra.mxu0 0.0
  %1352 = vmatprep.subr.mxu0 0.0
  %1353 = vmatpush1.msra.mxu0 0.0
  %1354 = vmatprep.subr.mxu0 0.0
  %1355 = vmatpush1.msra.mxu0 0.0
  %1356 = vmatprep.subr.mxu0 0.0
  %1357 = vmatpush1.msra.mxu0 0.0
  %1358 = vmatprep.subr.mxu0 0.0
  %1359 = vmatpush1.msra.mxu0 0.0
  %1360 = vmatprep.subr.mxu0 0.0
  %1361 = vmatpush1.msra.mxu0 0.0
  %1362 = vmatprep.subr.mxu0 0.0
  %1363 = vmatpush1.msra.mxu0 0.0
  %1364 = vmatprep.subr.mxu0 0.0
  %1365 = vmatpush1.msra.mxu0 0.0
  %1366 = vmatprep.subr.mxu0 0.0
  %1367 = vmatpush1.msra.mxu0 0.0
  %1368 = vmatprep.subr.mxu0 0.0
  %1369 = vmatpush1.msra.mxu0 0.0
  %1370 = vmatprep.subr.mxu0 0.0
  %1371 = vmatpush1.msra.mxu0 0.0
  %1372 = vmatprep.subr.mxu0 0.0
  %1373 = vmatpush1.msra.mxu0 0.0
  %1374 = vmatprep.mubr.f32.mxu0 0.0
  %1375 = vmatmul.mubr.f32.gmra.mrb[0].mxu0 %v1237
  %v1376 = vpop.f32.mrb[0].mxu0
  %v1377 = vadd.f32 0.0, %v1376
  %v1378 = vpop.f32.mrb[0].mxu0
  %v1379 = vadd.f32 0.0, %v1378
  %1380 = vdwg.mxu0
  %v1381 = vadd.f32 %v189, %v1306
  %v1382 = vadd.f32 %v191, %v1308
  %v1383 = vadd.f32 %v302, %v1377
  %v1384 = vadd.f32 %v304, %v1379
  %v1385 = vxor.u32 %v1381, 2147483648
  %v1386 = vmul.f32 %v1385, 1.442695
  %v1387 = vpow.pop %v1386
  %v1388 = vadd.f32 %v1387, 1.0
  %v1389 = vrcp.pop %v1388
  %v1390 = vmul.f32 1.0, %v1389
  %v1391 = vxor.u32 %v1382, 2147483648
  %v1392 = vmul.f32 %v1391, 1.442695
  %v1393 = vpow.pop %v1392
  %v1394 = vadd.f32 %v1393, 1.0
  %v1395 = vrcp.pop %v1394
  %v1396 = vmul.f32 1.0, %v1395
  %v1397 = vtanh.pop %v1383
  %v1398 = vxor.u32 %v1384, 2147483648
  %v1399 = vmul.f32 %v1398, 1.442695
  %v1400 = vpow.pop %v1399
  %v1401 = vadd.f32 %v1400, 1.0
  %v1402 = vrcp.pop %v1401
  %v1403 = vmul.f32 1.0, %v1402
  %v1404 = vmul.f32 %v1396, %v1235
  %v1405 = vmul.f32 %v1390, %v1397
  %v1406 = vadd.f32 %v1404, %v1405
  %v1407 = vtanh.pop %v1406
  %v1408 = vmul.f32 %v1403, %v1407
  %1409 = vst [vmem:[#allocation4 + $0x28] sm:$0xff] %v1408
  %1410 = vmatprep.subr.mxu0 %v319
  %1411 = vmatpush1.msra.mxu0 %v318
  %1412 = vmatprep.subr.mxu0 %v323
  %1413 = vmatpush1.msra.mxu0 %v322
  %1414 = vmatprep.subr.mxu0 %v327
  %1415 = vmatpush1.msra.mxu0 %v326
  %1416 = vmatprep.subr.mxu0 %v331
  %1417 = vmatpush1.msra.mxu0 %v330
  %1418 = vmatprep.subr.mxu0 %v335
  %1419 = vmatpush1.msra.mxu0 %v334
  %1420 = vmatprep.subr.mxu0 %v339
  %1421 = vmatpush1.msra.mxu0 %v338
  %1422 = vmatprep.subr.mxu0 %v343
  %1423 = vmatpush1.msra.mxu0 %v342
  %1424 = vmatprep.subr.mxu0 %v347
  %1425 = vmatpush1.msra.mxu0 %v346
  %1426 = vmatprep.subr.mxu0 %v351
  %1427 = vmatpush1.msra.mxu0 %v350
  %1428 = vmatprep.subr.mxu0 %v355
  %1429 = vmatpush1.msra.mxu0 %v354
  %1430 = vmatprep.subr.mxu0 %v359
  %1431 = vmatpush1.msra.mxu0 %v358
  %1432 = vmatprep.subr.mxu0 %v363
  %1433 = vmatpush1.msra.mxu0 %v362
  %1434 = vmatprep.subr.mxu0 %v367
  %1435 = vmatpush1.msra.mxu0 %v366
  %1436 = vmatprep.subr.mxu0 %v371
  %1437 = vmatpush1.msra.mxu0 %v370
  %1438 = vmatprep.subr.mxu0 %v375
  %1439 = vmatpush1.msra.mxu0 %v374
  %1440 = vmatprep.subr.mxu0 %v379
  %1441 = vmatpush1.msra.mxu0 %v378
  %1442 = vmatprep.subr.mxu0 0.0
  %1443 = vmatpush1.msra.mxu0 0.0
  %1444 = vmatprep.subr.mxu0 0.0
  %1445 = vmatpush1.msra.mxu0 0.0
  %1446 = vmatprep.subr.mxu0 0.0
  %1447 = vmatpush1.msra.mxu0 0.0
  %1448 = vmatprep.subr.mxu0 0.0
  %1449 = vmatpush1.msra.mxu0 0.0
  %1450 = vmatprep.subr.mxu0 0.0
  %1451 = vmatpush1.msra.mxu0 0.0
  %1452 = vmatprep.subr.mxu0 0.0
  %1453 = vmatpush1.msra.mxu0 0.0
  %1454 = vmatprep.subr.mxu0 0.0
  %1455 = vmatpush1.msra.mxu0 0.0
  %1456 = vmatprep.subr.mxu0 0.0
  %1457 = vmatpush1.msra.mxu0 0.0
  %1458 = vmatprep.subr.mxu0 0.0
  %1459 = vmatpush1.msra.mxu0 0.0
  %1460 = vmatprep.subr.mxu0 0.0
  %1461 = vmatpush1.msra.mxu0 0.0
  %1462 = vmatprep.subr.mxu0 0.0
  %1463 = vmatpush1.msra.mxu0 0.0
  %1464 = vmatprep.subr.mxu0 0.0
  %1465 = vmatpush1.msra.mxu0 0.0
  %1466 = vmatprep.subr.mxu0 0.0
  %1467 = vmatpush1.msra.mxu0 0.0
  %1468 = vmatprep.subr.mxu0 0.0
  %1469 = vmatpush1.msra.mxu0 0.0
  %1470 = vmatprep.subr.mxu0 0.0
  %1471 = vmatpush1.msra.mxu0 0.0
  %1472 = vmatprep.subr.mxu0 0.0
  %1473 = vmatpush1.msra.mxu0 0.0
  %1474 = vmatprep.mubr.f32.mxu0 0.0
  %1475 = vmatmul.mubr.f32.gmra.mrb[0].mxu0 %v1408
  %v1476 = vpop.f32.mrb[0].mxu0
  %v1477 = vadd.f32 0.0, %v1476
  %v1478 = vpop.f32.mrb[0].mxu0
  %v1479 = vadd.f32 0.0, %v1478
  %1480 = vdwg.mxu0
  %1481 = vmatprep.subr.mxu0 %v321
  %1482 = vmatpush1.msra.mxu0 %v320
  %1483 = vmatprep.subr.mxu0 %v325
  %1484 = vmatpush1.msra.mxu0 %v324
  %1485 = vmatprep.subr.mxu0 %v329
  %1486 = vmatpush1.msra.mxu0 %v328
  %1487 = vmatprep.subr.mxu0 %v333
  %1488 = vmatpush1.msra.mxu0 %v332
  %1489 = vmatprep.subr.mxu0 %v337
  %1490 = vmatpush1.msra.mxu0 %v336
  %1491 = vmatprep.subr.mxu0 %v341
  %1492 = vmatpush1.msra.mxu0 %v340
  %1493 = vmatprep.subr.mxu0 %v345
  %1494 = vmatpush1.msra.mxu0 %v344
  %1495 = vmatprep.subr.mxu0 %v349
  %1496 = vmatpush1.msra.mxu0 %v348
  %1497 = vmatprep.subr.mxu0 %v353
  %1498 = vmatpush1.msra.mxu0 %v352
  %1499 = vmatprep.subr.mxu0 %v357
  %1500 = vmatpush1.msra.mxu0 %v356
  %1501 = vmatprep.subr.mxu0 %v361
  %1502 = vmatpush1.msra.mxu0 %v360
  %1503 = vmatprep.subr.mxu0 %v365
  %1504 = vmatpush1.msra.mxu0 %v364
  %1505 = vmatprep.subr.mxu0 %v369
  %1506 = vmatpush1.msra.mxu0 %v368
  %1507 = vmatprep.subr.mxu0 %v373
  %1508 = vmatpush1.msra.mxu0 %v372
  %1509 = vmatprep.subr.mxu0 %v377
  %1510 = vmatpush1.msra.mxu0 %v376
  %1511 = vmatprep.subr.mxu0 %v381
  %1512 = vmatpush1.msra.mxu0 %v380
  %1513 = vmatprep.subr.mxu0 0.0
  %1514 = vmatpush1.msra.mxu0 0.0
  %1515 = vmatprep.subr.mxu0 0.0
  %1516 = vmatpush1.msra.mxu0 0.0
  %1517 = vmatprep.subr.mxu0 0.0
  %1518 = vmatpush1.msra.mxu0 0.0
  %1519 = vmatprep.subr.mxu0 0.0
  %1520 = vmatpush1.msra.mxu0 0.0
  %1521 = vmatprep.subr.mxu0 0.0
  %1522 = vmatpush1.msra.mxu0 0.0
  %1523 = vmatprep.subr.mxu0 0.0
  %1524 = vmatpush1.msra.mxu0 0.0
  %1525 = vmatprep.subr.mxu0 0.0
  %1526 = vmatpush1.msra.mxu0 0.0
  %1527 = vmatprep.subr.mxu0 0.0
  %1528 = vmatpush1.msra.mxu0 0.0
  %1529 = vmatprep.subr.mxu0 0.0
  %1530 = vmatpush1.msra.mxu0 0.0
  %1531 = vmatprep.subr.mxu0 0.0
  %1532 = vmatpush1.msra.mxu0 0.0
  %1533 = vmatprep.subr.mxu0 0.0
  %1534 = vmatpush1.msra.mxu0 0.0
  %1535 = vmatprep.subr.mxu0 0.0
  %1536 = vmatpush1.msra.mxu0 0.0
  %1537 = vmatprep.subr.mxu0 0.0
  %1538 = vmatpush1.msra.mxu0 0.0
  %1539 = vmatprep.subr.mxu0 0.0
  %1540 = vmatpush1.msra.mxu0 0.0
  %1541 = vmatprep.subr.mxu0 0.0
  %1542 = vmatpush1.msra.mxu0 0.0
  %1543 = vmatprep.subr.mxu0 0.0
  %1544 = vmatpush1.msra.mxu0 0.0
  %1545 = vmatprep.mubr.f32.mxu0 0.0
  %1546 = vmatmul.mubr.f32.gmra.mrb[0].mxu0 %v1408
  %v1547 = vpop.f32.mrb[0].mxu0
  %v1548 = vadd.f32 0.0, %v1547
  %v1549 = vpop.f32.mrb[0].mxu0
  %v1550 = vadd.f32 0.0, %v1549
  %1551 = vdwg.mxu0
  %v1552 = vadd.f32 %v195, %v1477
  %v1553 = vadd.f32 %v197, %v1479
  %v1554 = vadd.f32 %v308, %v1548
  %v1555 = vadd.f32 %v310, %v1550
  %v1556 = vxor.u32 %v1552, 2147483648
  %v1557 = vmul.f32 %v1556, 1.442695
  %v1558 = vpow.pop %v1557
  %v1559 = vadd.f32 %v1558, 1.0
  %v1560 = vrcp.pop %v1559
  %v1561 = vmul.f32 1.0, %v1560
  %v1562 = vxor.u32 %v1553, 2147483648
  %v1563 = vmul.f32 %v1562, 1.442695
  %v1564 = vpow.pop %v1563
  %v1565 = vadd.f32 %v1564, 1.0
  %v1566 = vrcp.pop %v1565
  %v1567 = vmul.f32 1.0, %v1566
  %v1568 = vtanh.pop %v1554
  %v1569 = vxor.u32 %v1555, 2147483648
  %v1570 = vmul.f32 %v1569, 1.442695
  %v1571 = vpow.pop %v1570
  %v1572 = vadd.f32 %v1571, 1.0
  %v1573 = vrcp.pop %v1572
  %v1574 = vmul.f32 1.0, %v1573
  %v1575 = vmul.f32 %v1567, %v1406
  %v1576 = vmul.f32 %v1561, %v1568
  %v1577 = vadd.f32 %v1575, %v1576
  %v1578 = vtanh.pop %v1577
  %v1579 = vmul.f32 %v1574, %v1578
  %1580 = vst [vmem:[#allocation4 + $0x30] sm:$0xff] %v1579
  %1581 = vmatprep.subr.mxu0 %v319
  %1582 = vmatpush1.msra.mxu0 %v318
  %1583 = vmatprep.subr.mxu0 %v323
  %1584 = vmatpush1.msra.mxu0 %v322
  %1585 = vmatprep.subr.mxu0 %v327
  %1586 = vmatpush1.msra.mxu0 %v326
  %1587 = vmatprep.subr.mxu0 %v331
  %1588 = vmatpush1.msra.mxu0 %v330
  %1589 = vmatprep.subr.mxu0 %v335
  %1590 = vmatpush1.msra.mxu0 %v334
  %1591 = vmatprep.subr.mxu0 %v339
  %1592 = vmatpush1.msra.mxu0 %v338
  %1593 = vmatprep.subr.mxu0 %v343
  %1594 = vmatpush1.msra.mxu0 %v342
  %1595 = vmatprep.subr.mxu0 %v347
  %1596 = vmatpush1.msra.mxu0 %v346
  %1597 = vmatprep.subr.mxu0 %v351
  %1598 = vmatpush1.msra.mxu0 %v350
  %1599 = vmatprep.subr.mxu0 %v355
  %1600 = vmatpush1.msra.mxu0 %v354
  %1601 = vmatprep.subr.mxu0 %v359
  %1602 = vmatpush1.msra.mxu0 %v358
  %1603 = vmatprep.subr.mxu0 %v363
  %1604 = vmatpush1.msra.mxu0 %v362
  %1605 = vmatprep.subr.mxu0 %v367
  %1606 = vmatpush1.msra.mxu0 %v366
  %1607 = vmatprep.subr.mxu0 %v371
  %1608 = vmatpush1.msra.mxu0 %v370
  %1609 = vmatprep.subr.mxu0 %v375
  %1610 = vmatpush1.msra.mxu0 %v374
  %1611 = vmatprep.subr.mxu0 %v379
  %1612 = vmatpush1.msra.mxu0 %v378
  %1613 = vmatprep.subr.mxu0 0.0
  %1614 = vmatpush1.msra.mxu0 0.0
  %1615 = vmatprep.subr.mxu0 0.0
  %1616 = vmatpush1.msra.mxu0 0.0
  %1617 = vmatprep.subr.mxu0 0.0
  %1618 = vmatpush1.msra.mxu0 0.0
  %1619 = vmatprep.subr.mxu0 0.0
  %1620 = vmatpush1.msra.mxu0 0.0
  %1621 = vmatprep.subr.mxu0 0.0
  %1622 = vmatpush1.msra.mxu0 0.0
  %1623 = vmatprep.subr.mxu0 0.0
  %1624 = vmatpush1.msra.mxu0 0.0
  %1625 = vmatprep.subr.mxu0 0.0
  %1626 = vmatpush1.msra.mxu0 0.0
  %1627 = vmatprep.subr.mxu0 0.0
  %1628 = vmatpush1.msra.mxu0 0.0
  %1629 = vmatprep.subr.mxu0 0.0
  %1630 = vmatpush1.msra.mxu0 0.0
  %1631 = vmatprep.subr.mxu0 0.0
  %1632 = vmatpush1.msra.mxu0 0.0
  %1633 = vmatprep.subr.mxu0 0.0
  %1634 = vmatpush1.msra.mxu0 0.0
  %1635 = vmatprep.subr.mxu0 0.0
  %1636 = vmatpush1.msra.mxu0 0.0
  %1637 = vmatprep.subr.mxu0 0.0
  %1638 = vmatpush1.msra.mxu0 0.0
  %1639 = vmatprep.subr.mxu0 0.0
  %1640 = vmatpush1.msra.mxu0 0.0
  %1641 = vmatprep.subr.mxu0 0.0
  %1642 = vmatpush1.msra.mxu0 0.0
  %1643 = vmatprep.subr.mxu0 0.0
  %1644 = vmatpush1.msra.mxu0 0.0
  %1645 = vmatprep.mubr.f32.mxu0 0.0
  %1646 = vmatmul.mubr.f32.gmra.mrb[0].mxu0 %v1579
  %v1647 = vpop.f32.mrb[0].mxu0
  %v1648 = vadd.f32 0.0, %v1647
  %v1649 = vpop.f32.mrb[0].mxu0
  %v1650 = vadd.f32 0.0, %v1649
  %1651 = vdwg.mxu0
  %1652 = vmatprep.subr.mxu0 %v321
  %1653 = vmatpush1.msra.mxu0 %v320
  %1654 = vmatprep.subr.mxu0 %v325
  %1655 = vmatpush1.msra.mxu0 %v324
  %1656 = vmatprep.subr.mxu0 %v329
  %1657 = vmatpush1.msra.mxu0 %v328
  %1658 = vmatprep.subr.mxu0 %v333
  %1659 = vmatpush1.msra.mxu0 %v332
  %1660 = vmatprep.subr.mxu0 %v337
  %1661 = vmatpush1.msra.mxu0 %v336
  %1662 = vmatprep.subr.mxu0 %v341
  %1663 = vmatpush1.msra.mxu0 %v340
  %1664 = vmatprep.subr.mxu0 %v345
  %1665 = vmatpush1.msra.mxu0 %v344
  %1666 = vmatprep.subr.mxu0 %v349
  %1667 = vmatpush1.msra.mxu0 %v348
  %1668 = vmatprep.subr.mxu0 %v353
  %1669 = vmatpush1.msra.mxu0 %v352
  %1670 = vmatprep.subr.mxu0 %v357
  %1671 = vmatpush1.msra.mxu0 %v356
  %1672 = vmatprep.subr.mxu0 %v361
  %1673 = vmatpush1.msra.mxu0 %v360
  %1674 = vmatprep.subr.mxu0 %v365
  %1675 = vmatpush1.msra.mxu0 %v364
  %1676 = vmatprep.subr.mxu0 %v369
  %1677 = vmatpush1.msra.mxu0 %v368
  %1678 = vmatprep.subr.mxu0 %v373
  %1679 = vmatpush1.msra.mxu0 %v372
  %1680 = vmatprep.subr.mxu0 %v377
  %1681 = vmatpush1.msra.mxu0 %v376
  %1682 = vmatprep.subr.mxu0 %v381
  %1683 = vmatpush1.msra.mxu0 %v380
  %1684 = vmatprep.subr.mxu0 0.0
  %1685 = vmatpush1.msra.mxu0 0.0
  %1686 = vmatprep.subr.mxu0 0.0
  %1687 = vmatpush1.msra.mxu0 0.0
  %1688 = vmatprep.subr.mxu0 0.0
  %1689 = vmatpush1.msra.mxu0 0.0
  %1690 = vmatprep.subr.mxu0 0.0
  %1691 = vmatpush1.msra.mxu0 0.0
  %1692 = vmatprep.subr.mxu0 0.0
  %1693 = vmatpush1.msra.mxu0 0.0
  %1694 = vmatprep.subr.mxu0 0.0
  %1695 = vmatpush1.msra.mxu0 0.0
  %1696 = vmatprep.subr.mxu0 0.0
  %1697 = vmatpush1.msra.mxu0 0.0
  %1698 = vmatprep.subr.mxu0 0.0
  %1699 = vmatpush1.msra.mxu0 0.0
  %1700 = vmatprep.subr.mxu0 0.0
  %1701 = vmatpush1.msra.mxu0 0.0
  %1702 = vmatprep.subr.mxu0 0.0
  %1703 = vmatpush1.msra.mxu0 0.0
  %1704 = vmatprep.subr.mxu0 0.0
  %1705 = vmatpush1.msra.mxu0 0.0
  %1706 = vmatprep.subr.mxu0 0.0
  %1707 = vmatpush1.msra.mxu0 0.0
  %1708 = vmatprep.subr.mxu0 0.0
  %1709 = vmatpush1.msra.mxu0 0.0
  %1710 = vmatprep.subr.mxu0 0.0
  %1711 = vmatpush1.msra.mxu0 0.0
  %1712 = vmatprep.subr.mxu0 0.0
  %1713 = vmatpush1.msra.mxu0 0.0
  %1714 = vmatprep.subr.mxu0 0.0
  %1715 = vmatpush1.msra.mxu0 0.0
  %1716 = vmatprep.mubr.f32.mxu0 0.0
  %1717 = vmatmul.mubr.f32.gmra.mrb[0].mxu0 %v1579
  %v1718 = vpop.f32.mrb[0].mxu0
  %v1719 = vadd.f32 0.0, %v1718
  %v1720 = vpop.f32.mrb[0].mxu0
  %v1721 = vadd.f32 0.0, %v1720
  %1722 = vdwg.mxu0
  %v1723 = vadd.f32 %v201, %v1648
  %v1724 = vadd.f32 %v203, %v1650
  %v1725 = vadd.f32 %v314, %v1719
  %v1726 = vadd.f32 %v316, %v1721
  %v1727 = vxor.u32 %v1723, 2147483648
  %v1728 = vmul.f32 %v1727, 1.442695
  %v1729 = vpow.pop %v1728
  %v1730 = vadd.f32 %v1729, 1.0
  %v1731 = vrcp.pop %v1730
  %v1732 = vmul.f32 1.0, %v1731
  %v1733 = vxor.u32 %v1724, 2147483648
  %v1734 = vmul.f32 %v1733, 1.442695
  %v1735 = vpow.pop %v1734
  %v1736 = vadd.f32 %v1735, 1.0
  %v1737 = vrcp.pop %v1736
  %v1738 = vmul.f32 1.0, %v1737
  %v1739 = vtanh.pop %v1725
  %v1740 = vxor.u32 %v1726, 2147483648
  %v1741 = vmul.f32 %v1740, 1.442695
  %v1742 = vpow.pop %v1741
  %v1743 = vadd.f32 %v1742, 1.0
  %v1744 = vrcp.pop %v1743
  %v1745 = vmul.f32 1.0, %v1744
  %v1746 = vmul.f32 %v1738, %v1577
  %v1747 = vmul.f32 %v1732, %v1739
  %v1748 = vadd.f32 %v1746, %v1747
  %v1749 = vtanh.pop %v1748
  %v1750 = vmul.f32 %v1745, %v1749
  %1751 = vst [vmem:[#allocation4 + $0x38] sm:$0xff] %v1750
  %1752 = vst [vmem:[#allocation2] sm:$0xff] %v1750
  %1753 = vst [vmem:[#allocation3] sm:$0xff] %v1748
  %v1754 = vld [vmem:[#allocation4] sm:$0xff]
  %v1755 = vld [vmem:[#allocation4 + $0x8] sm:$0xff]
  %v1756 = vld [vmem:[#allocation4 + $0x10] sm:$0xff]
  %v1757 = vld [vmem:[#allocation4 + $0x18] sm:$0xff]
  %v1758 = vld [vmem:[#allocation4 + $0x20] sm:$0xff]
  %v1759 = vld [vmem:[#allocation4 + $0x28] sm:$0xff]
  %v1760 = vld [vmem:[#allocation4 + $0x30] sm:$0xff]
  %v1761 = vld [vmem:[#allocation4 + $0x38] sm:$0xff]
  %v1762 = vld [vmem:[%s4] sm:$0xff]
  %v1763 = vld [vmem:[%s4 + $0x8] sm:$0xff]
  %v1764 = vld [vmem:[%s4 + $0x10] sm:$0xff]
  %v1765 = vld [vmem:[%s4 + $0x18] sm:$0xff]
  %v1766 = vld [vmem:[%s4 + $0x20] sm:$0xff]
  %v1767 = vld [vmem:[%s4 + $0x28] sm:$0xff]
  %v1768 = vld [vmem:[%s4 + $0x30] sm:$0xff]
  %v1769 = vld [vmem:[%s4 + $0x38] sm:$0xff]
  %v1770 = vld [vmem:[%s4 + $0x40] sm:$0xff]
  %v1771 = vld [vmem:[%s4 + $0x48] sm:$0xff]
  %v1772 = vld [vmem:[%s4 + $0x50] sm:$0xff]
  %v1773 = vld [vmem:[%s4 + $0x58] sm:$0xff]
  %v1774 = vld [vmem:[%s4 + $0x60] sm:$0xff]
  %v1775 = vld [vmem:[%s4 + $0x68] sm:$0xff]
  %v1776 = vld [vmem:[%s4 + $0x70] sm:$0xff]
  %v1777 = vld [vmem:[%s4 + $0x78] sm:$0xff]
  %v1778 = vld [vmem:[%s5] sm:$0x1]
  %v1780 = vlaneseq
  %v1781 = vshrl.u32 %v1780, 7
  %v1782 = vsub.s32 0, %v1781
  %v1783 = vrot.slane %v1778, %v1782
  %1785 = vmatprep.subr.mxu0 0.0
  %1786 = vmatpush1.msra.mxu0 %v1762
  %1787 = vmatprep.subr.mxu0 0.0
  %1788 = vmatpush1.msra.mxu0 %v1763
  %1789 = vmatprep.subr.mxu0 0.0
  %1790 = vmatpush1.msra.mxu0 %v1764
  %1791 = vmatprep.subr.mxu0 0.0
  %1792 = vmatpush1.msra.mxu0 %v1765
  %1793 = vmatprep.subr.mxu0 0.0
  %1794 = vmatpush1.msra.mxu0 %v1766
  %1795 = vmatprep.subr.mxu0 0.0
  %1796 = vmatpush1.msra.mxu0 %v1767
  %1797 = vmatprep.subr.mxu0 0.0
  %1798 = vmatpush1.msra.mxu0 %v1768
  %1799 = vmatprep.subr.mxu0 0.0
  %1800 = vmatpush1.msra.mxu0 %v1769
  %1801 = vmatprep.subr.mxu0 0.0
  %1802 = vmatpush1.msra.mxu0 %v1770
  %1803 = vmatprep.subr.mxu0 0.0
  %1804 = vmatpush1.msra.mxu0 %v1771
  %1805 = vmatprep.subr.mxu0 0.0
  %1806 = vmatpush1.msra.mxu0 %v1772
  %1807 = vmatprep.subr.mxu0 0.0
  %1808 = vmatpush1.msra.mxu0 %v1773
  %1809 = vmatprep.subr.mxu0 0.0
  %1810 = vmatpush1.msra.mxu0 %v1774
  %1811 = vmatprep.subr.mxu0 0.0
  %1812 = vmatpush1.msra.mxu0 %v1775
  %1813 = vmatprep.subr.mxu0 0.0
  %1814 = vmatpush1.msra.mxu0 %v1776
  %1815 = vmatprep.subr.mxu0 0.0
  %1816 = vmatpush1.msra.mxu0 %v1777
  %1817 = vmatprep.subr.mxu0 0.0
  %1818 = vmatpush1.msra.mxu0 0.0
  %1819 = vmatprep.subr.mxu0 0.0
  %1820 = vmatpush1.msra.mxu0 0.0
  %1821 = vmatprep.subr.mxu0 0.0
  %1822 = vmatpush1.msra.mxu0 0.0
  %1823 = vmatprep.subr.mxu0 0.0
  %1824 = vmatpush1.msra.mxu0 0.0
  %1825 = vmatprep.subr.mxu0 0.0
  %1826 = vmatpush1.msra.mxu0 0.0
  %1827 = vmatprep.subr.mxu0 0.0
  %1828 = vmatpush1.msra.mxu0 0.0
  %1829 = vmatprep.subr.mxu0 0.0
  %1830 = vmatpush1.msra.mxu0 0.0
  %1831 = vmatprep.subr.mxu0 0.0
  %1832 = vmatpush1.msra.mxu0 0.0
  %1833 = vmatprep.subr.mxu0 0.0
  %1834 = vmatpush1.msra.mxu0 0.0
  %1835 = vmatprep.subr.mxu0 0.0
  %1836 = vmatpush1.msra.mxu0 0.0
  %1837 = vmatprep.subr.mxu0 0.0
  %1838 = vmatpush1.msra.mxu0 0.0
  %1839 = vmatprep.subr.mxu0 0.0
  %1840 = vmatpush1.msra.mxu0 0.0
  %1841 = vmatprep.subr.mxu0 0.0
  %1842 = vmatpush1.msra.mxu0 0.0
  %1843 = vmatprep.subr.mxu0 0.0
  %1844 = vmatpush1.msra.mxu0 0.0
  %1845 = vmatprep.subr.mxu0 0.0
  %1846 = vmatpush1.msra.mxu0 0.0
  %1847 = vmatprep.subr.mxu0 0.0
  %1848 = vmatpush1.msra.mxu0 0.0
  %1849 = vmatprep.mubr.f32.mxu0 0.0
  %1850 = vmatmul.mubr.f32.gmra.mrb[0].mxu0 %v1754
  %v1851 = vpop.f32.mrb[0].mxu0
  %v1852 = vadd.f32 %v1783, %v1851
  %v1853 = vpop.f32.mrb[0].mxu0
  %1854 = vmatprep.mubr.f32.mxu0 0.0
  %1855 = vmatmul.mubr.f32.gmra.mrb[0].mxu0 %v1755
  %v1856 = vpop.f32.mrb[0].mxu0
  %v1857 = vadd.f32 %v1783, %v1856
  %v1858 = vpop.f32.mrb[0].mxu0
  %1859 = vmatprep.mubr.f32.mxu0 0.0
  %1860 = vmatmul.mubr.f32.gmra.mrb[0].mxu0 %v1756
  %v1861 = vpop.f32.mrb[0].mxu0
  %v1862 = vadd.f32 %v1783, %v1861
  %v1863 = vpop.f32.mrb[0].mxu0
  %1864 = vmatprep.mubr.f32.mxu0 0.0
  %1865 = vmatmul.mubr.f32.gmra.mrb[0].mxu0 %v1757
  %v1866 = vpop.f32.mrb[0].mxu0
  %v1867 = vadd.f32 %v1783, %v1866
  %v1868 = vpop.f32.mrb[0].mxu0
  %1869 = vmatprep.mubr.f32.mxu0 0.0
  %1870 = vmatmul.mubr.f32.gmra.mrb[0].mxu0 %v1758
  %v1871 = vpop.f32.mrb[0].mxu0
  %v1872 = vadd.f32 %v1783, %v1871
  %v1873 = vpop.f32.mrb[0].mxu0
  %1874 = vmatprep.mubr.f32.mxu0 0.0
  %1875 = vmatmul.mubr.f32.gmra.mrb[0].mxu0 %v1759
  %v1876 = vpop.f32.mrb[0].mxu0
  %v1877 = vadd.f32 %v1783, %v1876
  %v1878 = vpop.f32.mrb[0].mxu0
  %1879 = vmatprep.mubr.f32.mxu0 0.0
  %1880 = vmatmul.mubr.f32.gmra.mrb[0].mxu0 %v1760
  %v1881 = vpop.f32.mrb[0].mxu0
  %v1882 = vadd.f32 %v1783, %v1881
  %v1883 = vpop.f32.mrb[0].mxu0
  %1884 = vmatprep.mubr.f32.mxu0 0.0
  %1885 = vmatmul.mubr.f32.gmra.mrb[0].mxu0 %v1761
  %v1886 = vpop.f32.mrb[0].mxu0
  %v1887 = vadd.f32 %v1783, %v1886
  %v1888 = vpop.f32.mrb[0].mxu0
  %1889 = vdwg.mxu0
  %1890 = vmax.xlane.f32.xlu0 %v1852
  %v1891 = vpop.xlane.xlu0 %1890
  %1892 = vmax.xlane.f32.xlu0 %v1857
  %v1893 = vpop.xlane.xlu0 %1892
  %1894 = vmax.xlane.f32.xlu0 %v1862
  %v1895 = vpop.xlane.xlu0 %1894
  %1896 = vmax.xlane.f32.xlu0 %v1867
  %v1897 = vpop.xlane.xlu0 %1896
  %1898 = vmax.xlane.f32.xlu0 %v1872
  %v1899 = vpop.xlane.xlu0 %1898
  %1900 = vmax.xlane.f32.xlu0 %v1877
  %v1901 = vpop.xlane.xlu0 %1900
  %1902 = vmax.xlane.f32.xlu0 %v1882
  %v1903 = vpop.xlane.xlu0 %1902
  %1904 = vmax.xlane.f32.xlu0 %v1887
  %v1905 = vpop.xlane.xlu0 %1904
  %v1906 = vsub.f32 %v1852, %v1891
  %v1907 = vsub.f32 %v1857, %v1893
  %v1908 = vsub.f32 %v1862, %v1895
  %v1909 = vsub.f32 %v1867, %v1897
  %v1910 = vsub.f32 %v1872, %v1899
  %v1911 = vsub.f32 %v1877, %v1901
  %v1912 = vsub.f32 %v1882, %v1903
  %v1913 = vsub.f32 %v1887, %v1905
  %v1914 = vmul.f32 %v1906, 1.442695
  %v1915 = vpow.pop %v1914
  %v1916 = vmul.f32 %v1907, 1.442695
  %v1917 = vpow.pop %v1916
  %v1918 = vmul.f32 %v1908, 1.442695
  %v1919 = vpow.pop %v1918
  %v1920 = vmul.f32 %v1909, 1.442695
  %v1921 = vpow.pop %v1920
  %v1922 = vmul.f32 %v1910, 1.442695
  %v1923 = vpow.pop %v1922
  %v1924 = vmul.f32 %v1911, 1.442695
  %v1925 = vpow.pop %v1924
  %v1926 = vmul.f32 %v1912, 1.442695
  %v1927 = vpow.pop %v1926
  %v1928 = vmul.f32 %v1913, 1.442695
  %v1929 = vpow.pop %v1928
  %1930 = vadd.xlane.f32.xlu0 %v1915
  %v1931 = vpop.xlane.xlu0 %1930
  %1932 = vadd.xlane.f32.xlu0 %v1917
  %v1933 = vpop.xlane.xlu0 %1932
  %1934 = vadd.xlane.f32.xlu0 %v1919
  %v1935 = vpop.xlane.xlu0 %1934
  %1936 = vadd.xlane.f32.xlu0 %v1921
  %v1937 = vpop.xlane.xlu0 %1936
  %1938 = vadd.xlane.f32.xlu0 %v1923
  %v1939 = vpop.xlane.xlu0 %1938
  %1940 = vadd.xlane.f32.xlu0 %v1925
  %v1941 = vpop.xlane.xlu0 %1940
  %1942 = vadd.xlane.f32.xlu0 %v1927
  %v1943 = vpop.xlane.xlu0 %1942
  %1944 = vadd.xlane.f32.xlu0 %v1929
  %v1945 = vpop.xlane.xlu0 %1944
  %v1946 = vlog2.pop %v1931
  %v1947 = vmul.f32 %v1946, 0.6931472
  %v1948 = vlog2.pop %v1933
  %v1949 = vmul.f32 %v1948, 0.6931472
  %v1950 = vlog2.pop %v1935
  %v1951 = vmul.f32 %v1950, 0.6931472
  %v1952 = vlog2.pop %v1937
  %v1953 = vmul.f32 %v1952, 0.6931472
  %v1954 = vlog2.pop %v1939
  %v1955 = vmul.f32 %v1954, 0.6931472
  %v1956 = vlog2.pop %v1941
  %v1957 = vmul.f32 %v1956, 0.6931472
  %v1958 = vlog2.pop %v1943
  %v1959 = vmul.f32 %v1958, 0.6931472
  %v1960 = vlog2.pop %v1945
  %v1961 = vmul.f32 %v1960, 0.6931472
  %v1962 = vsub.f32 %v1906, %v1947
  %v1963 = vsub.f32 %v1907, %v1949
  %v1964 = vsub.f32 %v1908, %v1951
  %v1965 = vsub.f32 %v1909, %v1953
  %v1966 = vsub.f32 %v1910, %v1955
  %v1967 = vsub.f32 %v1911, %v1957
  %v1968 = vsub.f32 %v1912, %v1959
  %v1969 = vsub.f32 %v1913, %v1961
  %1970 = vst [vmem:[%s6] sm:$0xff] %v1962
  %1971 = vst [vmem:[%s6 + $0x8] sm:$0xff] %v1963
  %1972 = vst [vmem:[%s6 + $0x10] sm:$0xff] %v1964
  %1973 = vst [vmem:[%s6 + $0x18] sm:$0xff] %v1965
  %1974 = vst [vmem:[%s6 + $0x20] sm:$0xff] %v1966
  %1975 = vst [vmem:[%s6 + $0x28] sm:$0xff] %v1967
  %1976 = vst [vmem:[%s6 + $0x30] sm:$0xff] %v1968
  %1977 = vst [vmem:[%s6 + $0x38] sm:$0xff] %v1969
  // Predicated region
  $region30: #{morph_model_forward.1} parent=0 // pred_check
    _
  $region31: #{morph_model_forward.1} parent=0 // pred_check_branch
    %1979 = sbr.rel (0) target = $region33
  $region32: #{morph_model_forward.1} parent=0 // pred_region
    _
  $region33: #{morph_model_forward.1} parent=0 // pred_fallthru
    _
  // Predicated region
  $region34: #{morph_model_forward.1} parent=0 // pred_check
    _
  $region35: #{morph_model_forward.1} parent=0 // pred_check_branch
    %1981 = sbr.rel (0) target = $region37
  $region36: #{morph_model_forward.1} parent=0 // pred_region
    _
  $region37: #{morph_model_forward.1} parent=0 // pred_fallthru
    _

</llo_original>
